<compile_context>
chip_gen: v7x
topology: tpu7x:2x2x1
jax: 0.10.0
libtpu: 0.0.40
codegen_flags: <defaults>
</compile_context>

<pallas_src>
import jax
import jax.numpy as jnp
from jax.experimental import pallas as pl
from jax.experimental.pallas import tpu as pltpu


def _transition_kernel(x_ref, scale_ref, shift_ref, w_ref, b_ref, out_ref):
    # x_ref     : (nb, th, W, Cin)   bf16 NHWC activation block
    # scale_ref : (1, Cin)           bf16 folded BN scale = gamma / sqrt(var + eps)
    # shift_ref : (1, Cin)           bf16 folded BN shift = beta - mean * scale
    # w_ref     : (Cin, Coutp)       bf16 1x1 conv weight^T with 0.25 pool scale folded in
    # b_ref     : (1, Coutp)         f32 conv bias (zero padded to Coutp)
    # out_ref   : (nb, th//2, W//2, Coutp) f32
    nb, th, W, Cin = x_ref.shape
    coutp = w_ref.shape[1]

    # Inference BatchNorm + ReLU: (1, Cin) row broadcast over lanes, bf16 VPU.
    z = jnp.maximum(x_ref[...] * scale_ref[...] + shift_ref[...], 0.0)

    # 2x2 SUM pool BEFORE the 1x1 conv (both linear -> identical result; the
    # 0.25 scale is folded into the weight, so no extra full-tile multiply).
    # H pooling: split rows on a major (non-tiled) axis -> relayout-free adds.
    z4 = z.reshape(nb, th // 2, 2, W, Cin)
    zh = z4[:, :, 0] + z4[:, :, 1]                        # (nb, th//2, W, Cin)
    # W pooling: pair adjacent columns and reduce.
    zp = zh.reshape(nb, th // 2, W // 2, 2, Cin).sum(axis=3)

    # 1x1 conv == per-pixel channel matmul (MXU, bf16 operands, f32 accum).
    m = nb * (th // 2) * (W // 2)
    y = jnp.dot(zp.reshape(m, Cin), w_ref[...],
                preferred_element_type=jnp.float32)
    y = y + b_ref[...]                                     # (m, Coutp), f32
    out_ref[...] = y.reshape(nb, th // 2, W // 2, coutp).astype(out_ref.dtype)


def _vmem_limit_bytes():
    """~3/4 of physical VMEM: ~48 MiB on v7x (64 MiB/TC), ~96 MiB on v5e/v6e."""
    try:
        cap = int(pltpu.get_tpu_info().vmem_capacity_bytes)
        if cap <= 0:
            raise ValueError
    except Exception:
        cap = 64 * 1024 * 1024          # conservative fallback (v7x per-TC)
    return (cap * 3) // 4


def _choose_tiles(N, H, W, Cin, coutp, budget_bytes, target_m=512):
    """Pick (nb, th): batch elements and rows per grid step.

    Prefers whole-image blocks packed over batch until the MXU M dimension
    reaches `target_m` (or the VMEM budget); falls back to H-tiling with the
    largest even divisor of H that fits when a single image is too big.
    """
    def step_bytes(nb, th):
        tile_in = nb * th * W * Cin * 2                      # bf16 activations (x2 buffered)
        tile_out = nb * (th // 2) * (W // 2) * coutp * 4     # f32 output (x2 buffered)
        live = 2 * tile_in                                   # z / zh / zp intermediates
        params = 2 * (Cin * coutp * 2 + coutp * 4 + 2 * Cin * 2)
        return 2 * tile_in + 2 * tile_out + live + params

    m_img = (H // 2) * (W // 2)
    if step_bytes(1, H) <= budget_bytes:
        nb = 1
        for cand in [d for d in range(1, N + 1) if N % d == 0]:
            if step_bytes(cand, H) > budget_bytes:
                break
            nb = cand
            if cand * m_img >= target_m:
                break
        return nb, H
    # Single image exceeds the budget: tile H (largest even divisor that fits).
    th = 2
    for cand in range(H, 1, -1):
        if H % cand == 0 and cand % 2 == 0 and step_bytes(1, cand) <= budget_bytes:
            th = cand
            break
    return 1, th


def transition_block(x_nchw, gamma, beta, running_mean, running_var,
                     conv_w, conv_b, eps=1e-5):
    """x_nchw: (N, Cin, H, W) float32. Returns (N, Cout, H//2, W//2) float32."""
    N, Cin, H, W = x_nchw.shape
    Cout = conv_w.shape[0]
    assert H % 2 == 0 and W % 2 == 0

    coutp = ((Cout + 127) // 128) * 128          # lane-dense padded output channels
    vmem_limit = _vmem_limit_bytes()
    nb, th = _choose_tiles(N, H, W, Cin, coutp,
                           budget_bytes=int(vmem_limit * 0.8))

    # NCHW -> NHWC (channels on lanes), bf16 at the HBM boundary (halves the
    # dominant HBM read on this mem-bound op).
    x = jnp.transpose(x_nchw, (0, 2, 3, 1)).astype(jnp.bfloat16)

    # Fold BN params into scale/shift (inference-mode BN), computed in f32,
    # cast to bf16 for the bf16 VPU path.
    scale_f32 = gamma.astype(jnp.float32) / jnp.sqrt(running_var.astype(jnp.float32) + eps)
    shift_f32 = beta.astype(jnp.float32) - running_mean.astype(jnp.float32) * scale_f32
    scale = scale_f32.reshape(1, Cin).astype(jnp.bfloat16)
    shift = shift_f32.reshape(1, Cin).astype(jnp.bfloat16)

    # Conv weight (Cout, Cin, 1, 1) -> (Cin, Coutp) bf16 with the 0.25 pool
    # scale folded in (power of two -> exact); bias -> (1, Coutp) f32.
    w = conv_w.reshape(Cout, Cin).T.astype(jnp.float32) * 0.25
    w = jnp.pad(w, ((0, 0), (0, coutp - Cout))).astype(jnp.bfloat16)
    b = jnp.pad(conv_b.astype(jnp.float32), (0, coutp - Cout)).reshape(1, coutp)

    out_nhwc = pl.pallas_call(
        _transition_kernel,
        out_shape=jax.ShapeDtypeStruct((N, H // 2, W // 2, coutp), jnp.float32),
        grid_spec=pltpu.PrefetchScalarGridSpec(
            num_scalar_prefetch=0,
            grid=(N // nb, H // th),
            in_specs=[
                pl.BlockSpec((nb, th, W, Cin), lambda n, h: (n, h, 0, 0)),
                # Constant index maps -> fetched once, stay VMEM-resident.
                pl.BlockSpec((1, Cin), lambda n, h: (0, 0)),
                pl.BlockSpec((1, Cin), lambda n, h: (0, 0)),
                pl.BlockSpec((Cin, coutp), lambda n, h: (0, 0)),
                pl.BlockSpec((1, coutp), lambda n, h: (0, 0)),
            ],
            out_specs=pl.BlockSpec((nb, th // 2, W // 2, coutp),
                                   lambda n, h: (n, h, 0, 0)),
        ),
        compiler_params=pltpu.CompilerParams(
            dimension_semantics=("parallel", "parallel"),
            vmem_limit_bytes=vmem_limit),
    )(x, scale, shift, w, b)

    # Drop lane padding, NHWC -> NCHW to match the PyTorch output convention.
    return jnp.transpose(out_nhwc[..., :Cout], (0, 3, 1, 2))


def _reference(x_nchw, gamma, beta, running_mean, running_var,
               conv_w, conv_b, eps=1e-5):
    """Pure-JAX f32 reference mirroring the PyTorch forward (inference BN)."""
    g = gamma[None, :, None, None]
    bt = beta[None, :, None, None]
    m = running_mean[None, :, None, None]
    v = running_var[None, :, None, None]
    z = jnp.maximum((x_nchw - m) / jnp.sqrt(v + eps) * g + bt, 0.0)
    y = jnp.einsum('nchw,oc->nohw', z, conv_w.reshape(conv_w.shape[0], -1))
    y = y + conv_b[None, :, None, None]
    N, C, H, W = y.shape
    y = y.reshape(N, C, H // 2, 2, W // 2, 2).mean(axis=(3, 5))
    return y


if __name__ == "__main__":
    key = jax.random.PRNGKey(0)
    N, Cin, H, W = 2, 8, 16, 16
    compression = 0.5
    Cout = int(Cin * compression)

    k = jax.random.split(key, 7)
    x = jax.random.normal(k[0], (N, Cin, H, W), dtype=jnp.float32)
    gamma = 1.0 + 0.1 * jax.random.normal(k[1], (Cin,), dtype=jnp.float32)
    beta = 0.1 * jax.random.normal(k[2], (Cin,), dtype=jnp.float32)
    running_mean = 0.1 * jax.random.normal(k[3], (Cin,), dtype=jnp.float32)
    running_var = jnp.abs(1.0 + 0.1 * jax.random.normal(k[4], (Cin,),
                                                        dtype=jnp.float32))
    conv_w = (jax.random.normal(k[5], (Cout, Cin, 1, 1), dtype=jnp.float32)
              / jnp.sqrt(Cin))
    conv_b = 0.05 * jax.random.normal(k[6], (Cout,), dtype=jnp.float32)

    out = transition_block(x, gamma, beta, running_mean, running_var,
                           conv_w, conv_b)
    out = jax.block_until_ready(out)

    ref = _reference(x, gamma, beta, running_mean, running_var, conv_w, conv_b)
    assert out.shape == (N, Cout, H // 2, W // 2)
    # Tolerance reflects bf16 HBM input + bf16 BN/ReLU/pool + bf16 MXU operands
    # (f32 accumulation) vs. the f32 reference — acceptable for inference.
    assert jnp.allclose(out, ref, atol=5e-2, rtol=5e-2), \
        float(jnp.max(jnp.abs(out - ref)))

    print("KERNEL_OK")
</pallas_src>

<mosaic_0001>
module attributes {stable_mosaic.version = 11 : i64} {
  func.func @_transition_kernel(%arg0: i32, %arg1: i32, %arg2: memref<2x16x16x8xbf16, #tpu.memory_space<vmem>>, %arg3: memref<1x8xbf16, #tpu.memory_space<vmem>>, %arg4: memref<1x8xbf16, #tpu.memory_space<vmem>>, %arg5: memref<8x128xbf16, #tpu.memory_space<vmem>>, %arg6: memref<1x128xf32, #tpu.memory_space<vmem>>, %arg7: memref<2x8x8x128xf32, #tpu.memory_space<vmem>>) attributes {dimension_semantics = [#tpu.dimension_semantics<parallel>, #tpu.dimension_semantics<parallel>], iteration_bounds = array<i64: 1, 1>, scalar_prefetch = 0 : i64, scratch_operands = 0 : i64, tpu.core_type = #tpu.core_type<tc>, window_params = [{transform_indices = @transform_0, window_bounds = array<i64: 2, 16, 16, 8>}, {pipeline_mode = #tpu.pipeline_mode<synchronous>, transform_indices = @transform_1, window_bounds = array<i64: 1, 8>}, {pipeline_mode = #tpu.pipeline_mode<synchronous>, transform_indices = @transform_2, window_bounds = array<i64: 1, 8>}, {pipeline_mode = #tpu.pipeline_mode<synchronous>, transform_indices = @transform_3, window_bounds = array<i64: 8, 128>}, {pipeline_mode = #tpu.pipeline_mode<synchronous>, transform_indices = @transform_4, window_bounds = array<i64: 1, 128>}, {transform_indices = @transform_5, window_bounds = array<i64: 2, 8, 8, 128>}]} {
    %c0 = arith.constant 0 : index
    %c0_0 = arith.constant 0 : index
    %c0_1 = arith.constant 0 : index
    %c0_2 = arith.constant 0 : index
    %0 = vector.load %arg2[%c0, %c0_0, %c0_1, %c0_2] : memref<2x16x16x8xbf16, #tpu.memory_space<vmem>>, vector<2x16x16x8xbf16>
    %c0_3 = arith.constant 0 : index
    %c0_4 = arith.constant 0 : index
    %1 = vector.load %arg3[%c0_3, %c0_4] : memref<1x8xbf16, #tpu.memory_space<vmem>>, vector<1x8xbf16>
    %2 = vector.shape_cast %1 : vector<1x8xbf16> to vector<1x1x1x8xbf16>
    %3 = vector.broadcast %2 : vector<1x1x1x8xbf16> to vector<2x16x16x8xbf16>
    %4 = arith.mulf %0, %3 : vector<2x16x16x8xbf16>
    %c0_5 = arith.constant 0 : index
    %c0_6 = arith.constant 0 : index
    %5 = vector.load %arg4[%c0_5, %c0_6] : memref<1x8xbf16, #tpu.memory_space<vmem>>, vector<1x8xbf16>
    %6 = vector.shape_cast %5 : vector<1x8xbf16> to vector<1x1x1x8xbf16>
    %7 = vector.broadcast %6 : vector<1x1x1x8xbf16> to vector<2x16x16x8xbf16>
    %8 = arith.addf %4, %7 : vector<2x16x16x8xbf16>
    %cst = arith.constant 0.000000e+00 : bf16
    %9 = vector.broadcast %cst : bf16 to vector<2x16x16x8xbf16>
    %10 = arith.maximumf %8, %9 : vector<2x16x16x8xbf16>
    %11 = vector.shape_cast %10 : vector<2x16x16x8xbf16> to vector<2x8x2x16x8xbf16>
    %12 = vector.extract_strided_slice %11 {offsets = [0, 0, 0, 0, 0], sizes = [2, 8, 1, 16, 8], strides = [1, 1, 1, 1, 1]} : vector<2x8x2x16x8xbf16> to vector<2x8x1x16x8xbf16>
    %13 = vector.shape_cast %12 : vector<2x8x1x16x8xbf16> to vector<2x8x16x8xbf16>
    %14 = vector.extract_strided_slice %11 {offsets = [0, 0, 1, 0, 0], sizes = [2, 8, 1, 16, 8], strides = [1, 1, 1, 1, 1]} : vector<2x8x2x16x8xbf16> to vector<2x8x1x16x8xbf16>
    %15 = vector.shape_cast %14 : vector<2x8x1x16x8xbf16> to vector<2x8x16x8xbf16>
    %16 = arith.addf %13, %15 : vector<2x8x16x8xbf16>
    %17 = vector.shape_cast %16 : vector<2x8x16x8xbf16> to vector<2x8x8x2x8xbf16>
    %18 = arith.extf %17 : vector<2x8x8x2x8xbf16> to vector<2x8x8x2x8xf32>
    %cst_7 = arith.constant dense<0.000000e+00> : vector<2x8x8x8xf32>
    %19 = vector.multi_reduction <add>, %18, %cst_7 [3] : vector<2x8x8x2x8xf32> to vector<2x8x8x8xf32>
    %20 = arith.truncf %19 : vector<2x8x8x8xf32> to vector<2x8x8x8xbf16>
    %21 = vector.shape_cast %20 : vector<2x8x8x8xbf16> to vector<128x8xbf16>
    %c0_8 = arith.constant 0 : index
    %c0_9 = arith.constant 0 : index
    %22 = vector.load %arg5[%c0_8, %c0_9] : memref<8x128xbf16, #tpu.memory_space<vmem>>, vector<8x128xbf16>
    %cst_10 = arith.constant dense<0.000000e+00> : vector<128x128xf32>
    %23 = tpu.matmul %21, %22, %cst_10 {dimension_numbers = #tpu.dot_dimension_numbers<[1], [0], [0], [1], [0, 0, 1, 1], [], []>} : vector<128x8xbf16>, vector<8x128xbf16>, vector<128x128xf32> -> vector<128x128xf32>
    %c0_11 = arith.constant 0 : index
    %c0_12 = arith.constant 0 : index
    %24 = vector.load %arg6[%c0_11, %c0_12] : memref<1x128xf32, #tpu.memory_space<vmem>>, vector<1x128xf32>
    %25 = vector.broadcast %24 : vector<1x128xf32> to vector<128x128xf32>
    %26 = arith.addf %23, %25 : vector<128x128xf32>
    %27 = vector.shape_cast %26 : vector<128x128xf32> to vector<2x8x8x128xf32>
    %c0_13 = arith.constant 0 : index
    %c0_14 = arith.constant 0 : index
    %c0_15 = arith.constant 0 : index
    %c0_16 = arith.constant 0 : index
    %28 = vector.load %arg7[%c0_13, %c0_14, %c0_15, %c0_16] : memref<2x8x8x128xf32, #tpu.memory_space<vmem>>, vector<2x8x8x128xf32>
    tpu.vector_store %arg7[%c0_13, %c0_14, %c0_15, %c0_16], %27 {strides = array<i32>} : memref<2x8x8x128xf32, #tpu.memory_space<vmem>>, vector<2x8x8x128xf32>,
    return
  }
  func.func @transform_0(%arg0: i32, %arg1: i32) -> (i32, i32, i32, i32) {
    %c0_i32 = arith.constant 0 : i32
    %c0_i32_0 = arith.constant 0 : i32
    %c0_i32_1 = arith.constant 0 : i32
    return %arg0, %arg1, %c0_i32, %c0_i32_0 : i32, i32, i32, i32
  }
  func.func @transform_1(%arg0: i32, %arg1: i32) -> (i32, i32) {
    %c0_i32 = arith.constant 0 : i32
    %c0_i32_0 = arith.constant 0 : i32
    %c0_i32_1 = arith.constant 0 : i32
    return %c0_i32, %c0_i32_0 : i32, i32
  }
  func.func @transform_2(%arg0: i32, %arg1: i32) -> (i32, i32) {
    %c0_i32 = arith.constant 0 : i32
    %c0_i32_0 = arith.constant 0 : i32
    %c0_i32_1 = arith.constant 0 : i32
    return %c0_i32, %c0_i32_0 : i32, i32
  }
  func.func @transform_3(%arg0: i32, %arg1: i32) -> (i32, i32) {
    %c0_i32 = arith.constant 0 : i32
    %c0_i32_0 = arith.constant 0 : i32
    %c0_i32_1 = arith.constant 0 : i32
    return %c0_i32, %c0_i32_0 : i32, i32
  }
  func.func @transform_4(%arg0: i32, %arg1: i32) -> (i32, i32) {
    %c0_i32 = arith.constant 0 : i32
    %c0_i32_0 = arith.constant 0 : i32
    %c0_i32_1 = arith.constant 0 : i32
    return %c0_i32, %c0_i32_0 : i32, i32
  }
  func.func @transform_5(%arg0: i32, %arg1: i32) -> (i32, i32, i32, i32) {
    %c0_i32 = arith.constant 0 : i32
    %c0_i32_0 = arith.constant 0 : i32
    %c0_i32_1 = arith.constant 0 : i32
    return %arg0, %arg1, %c0_i32, %c0_i32_0 : i32, i32, i32, i32
  }
}

</mosaic_0001>

<llo_original>
// kernel: tpu_custom_call.1
$region0: #{tpu_custom_call.1}
  #allocation0 [shape = 'u32[]', space=smem, size = 0x4, offset = 0x4, fixed_abs, tag = 'smem constant byte address 0x4 - core index']
  #allocation1 [shape = 'u32[144,128]{1,0:T(1,128)}', space=vmem, size = 0x12000, scoped, tag = 'internal scratch']
  %s0 = inlined_call_operand.vmem [shape: bf16[2,16,16,8], index: 0, kind: input, shape index: {}]
  %s1 = inlined_call_operand.vmem [shape: bf16[1,8], index: 1, kind: input, shape index: {}]
  %s2 = inlined_call_operand.vmem [shape: bf16[1,8], index: 2, kind: input, shape index: {}]
  %s3 = inlined_call_operand.vmem [shape: bf16[8,128], index: 3, kind: input, shape index: {}]
  %s4 = inlined_call_operand.vmem [shape: f32[1,128], index: 4, kind: input, shape index: {}]
  %s5 = inlined_call_operand.hbm [shape: f32[2,8,8,128], index: 5, kind: output, shape index: {}]
  %s6 = sld [smem:[#allocation0]]
  $region30: #{tpu_custom_call.1} parent=0
    _
  %s8 = ssub.s32 1, %s6
  %s9 = scalar_select 0, %s8, %s6
  $region1: #{tpu_custom_call.1} parent=0
    #allocation2 [shape = 'u8[65536]{0}', space=vmem, size = 0x10000, scoped, tag = 'output window, operand 0, single buffered']
    #allocation3 [shape = 's32[1]{0}', space=sflag, size = 0x4, scoped, tag = 'scoped memory for tpu_custom_call.1']
    %10 = vsyncpa [#allocation3], 0
    // Predicated region
    $region2: #{tpu_custom_call.1} parent=1 // pred_check
      _
    $region3: #{tpu_custom_call.1} parent=1 // pred_check_branch
      %12 = sbr.rel (0) target = $region5
    $region4: #{tpu_custom_call.1} parent=1 // pred_region
      _
    $region5: #{tpu_custom_call.1} parent=1 // pred_fallthru
      _
    // Predicated region
    $region6: #{tpu_custom_call.1} parent=1 // pred_check
      _
    $region7: #{tpu_custom_call.1} parent=1 // pred_check_branch
      %14 = sbr.rel (0) target = $region9
    $region8: #{tpu_custom_call.1} parent=1 // pred_region
      _
    $region9: #{tpu_custom_call.1} parent=1 // pred_fallthru
      _
    // Predicated region
    $region10: #{tpu_custom_call.1} parent=1 // pred_check
      _
    $region11: #{tpu_custom_call.1} parent=1 // pred_check_branch
      %16 = sbr.rel (0) target = $region13
    $region12: #{tpu_custom_call.1} parent=1 // pred_region
      _
    $region13: #{tpu_custom_call.1} parent=1 // pred_fallthru
      _
    // Predicated region
    $region14: #{tpu_custom_call.1} parent=1 // pred_check
      _
    $region15: #{tpu_custom_call.1} parent=1 // pred_check_branch
      %18 = sbr.rel (0) target = $region17
    $region16: #{tpu_custom_call.1} parent=1 // pred_region
      _
    $region17: #{tpu_custom_call.1} parent=1 // pred_fallthru
      _
    // Predicated region
    $region18: #{tpu_custom_call.1} parent=1 // pred_check
      _
    $region19: #{tpu_custom_call.1} parent=1 // pred_check_branch
      %20 = sbr.rel (0) target = $region21
    $region20: #{tpu_custom_call.1} parent=1 // pred_region
      _
    $region21: #{tpu_custom_call.1} parent=1 // pred_fallthru
      _
    %v22 = vld [vmem:[%s0] sm:$0xf]
    %v23 = vld [vmem:[%s0 + $0x4] sm:$0xf]
    %v24 = vld [vmem:[%s0 + $0x8] sm:$0xf]
    %v25 = vld [vmem:[%s0 + $0xc] sm:$0xf]
    %v26 = vld [vmem:[%s0 + $0x10] sm:$0xf]
    %v27 = vld [vmem:[%s0 + $0x14] sm:$0xf]
    %v28 = vld [vmem:[%s0 + $0x18] sm:$0xf]
    %v29 = vld [vmem:[%s0 + $0x1c] sm:$0xf]
    %v30 = vld [vmem:[%s0 + $0x20] sm:$0xf]
    %v31 = vld [vmem:[%s0 + $0x24] sm:$0xf]
    %v32 = vld [vmem:[%s0 + $0x28] sm:$0xf]
    %v33 = vld [vmem:[%s0 + $0x2c] sm:$0xf]
    %v34 = vld [vmem:[%s0 + $0x30] sm:$0xf]
    %v35 = vld [vmem:[%s0 + $0x34] sm:$0xf]
    %v36 = vld [vmem:[%s0 + $0x38] sm:$0xf]
    %v37 = vld [vmem:[%s0 + $0x3c] sm:$0xf]
    %v38 = vld [vmem:[%s0 + $0x40] sm:$0xf]
    %v39 = vld [vmem:[%s0 + $0x44] sm:$0xf]
    %v40 = vld [vmem:[%s0 + $0x48] sm:$0xf]
    %v41 = vld [vmem:[%s0 + $0x4c] sm:$0xf]
    %v42 = vld [vmem:[%s0 + $0x50] sm:$0xf]
    %v43 = vld [vmem:[%s0 + $0x54] sm:$0xf]
    %v44 = vld [vmem:[%s0 + $0x58] sm:$0xf]
    %v45 = vld [vmem:[%s0 + $0x5c] sm:$0xf]
    %v46 = vld [vmem:[%s0 + $0x60] sm:$0xf]
    %v47 = vld [vmem:[%s0 + $0x64] sm:$0xf]
    %v48 = vld [vmem:[%s0 + $0x68] sm:$0xf]
    %v49 = vld [vmem:[%s0 + $0x6c] sm:$0xf]
    %v50 = vld [vmem:[%s0 + $0x70] sm:$0xf]
    %v51 = vld [vmem:[%s0 + $0x74] sm:$0xf]
    %v52 = vld [vmem:[%s0 + $0x78] sm:$0xf]
    %v53 = vld [vmem:[%s0 + $0x7c] sm:$0xf]
    %v54 = vld [vmem:[%s0 + $0x80] sm:$0xf]
    %v55 = vld [vmem:[%s0 + $0x84] sm:$0xf]
    %v56 = vld [vmem:[%s0 + $0x88] sm:$0xf]
    %v57 = vld [vmem:[%s0 + $0x8c] sm:$0xf]
    %v58 = vld [vmem:[%s0 + $0x90] sm:$0xf]
    %v59 = vld [vmem:[%s0 + $0x94] sm:$0xf]
    %v60 = vld [vmem:[%s0 + $0x98] sm:$0xf]
    %v61 = vld [vmem:[%s0 + $0x9c] sm:$0xf]
    %v62 = vld [vmem:[%s0 + $0xa0] sm:$0xf]
    %v63 = vld [vmem:[%s0 + $0xa4] sm:$0xf]
    %v64 = vld [vmem:[%s0 + $0xa8] sm:$0xf]
    %v65 = vld [vmem:[%s0 + $0xac] sm:$0xf]
    %v66 = vld [vmem:[%s0 + $0xb0] sm:$0xf]
    %v67 = vld [vmem:[%s0 + $0xb4] sm:$0xf]
    %v68 = vld [vmem:[%s0 + $0xb8] sm:$0xf]
    %v69 = vld [vmem:[%s0 + $0xbc] sm:$0xf]
    %v70 = vld [vmem:[%s0 + $0xc0] sm:$0xf]
    %v71 = vld [vmem:[%s0 + $0xc4] sm:$0xf]
    %v72 = vld [vmem:[%s0 + $0xc8] sm:$0xf]
    %v73 = vld [vmem:[%s0 + $0xcc] sm:$0xf]
    %v74 = vld [vmem:[%s0 + $0xd0] sm:$0xf]
    %v75 = vld [vmem:[%s0 + $0xd4] sm:$0xf]
    %v76 = vld [vmem:[%s0 + $0xd8] sm:$0xf]
    %v77 = vld [vmem:[%s0 + $0xdc] sm:$0xf]
    %v78 = vld [vmem:[%s0 + $0xe0] sm:$0xf]
    %v79 = vld [vmem:[%s0 + $0xe4] sm:$0xf]
    %v80 = vld [vmem:[%s0 + $0xe8] sm:$0xf]
    %v81 = vld [vmem:[%s0 + $0xec] sm:$0xf]
    %v82 = vld [vmem:[%s0 + $0xf0] sm:$0xf]
    %v83 = vld [vmem:[%s0 + $0xf4] sm:$0xf]
    %v84 = vld [vmem:[%s0 + $0xf8] sm:$0xf]
    %v85 = vld [vmem:[%s0 + $0xfc] sm:$0xf]
    %v86 = vld [vmem:[%s1] sm:$0x1]
    %v88 = vpack.i.b16 %v86, %v86
    %v90 = vlaneseq
    %v91 = vshrl.u32 %v90, 7
    %v92 = vsub.s32 0, %v91
    %v93 = vrot.slane %v88, %v92
    %v95 = vunpack.c.l.b16 %v93
    %v96 = vpack.c.b16 %v95, %v95
    %v98 = vmul.bf16 %v22, %v96
    %v99 = vmul.bf16 %v23, %v96
    %v100 = vmul.bf16 %v24, %v96
    %v101 = vmul.bf16 %v25, %v96
    %v102 = vmul.bf16 %v26, %v96
    %v103 = vmul.bf16 %v27, %v96
    %v104 = vmul.bf16 %v28, %v96
    %v105 = vmul.bf16 %v29, %v96
    %v106 = vmul.bf16 %v30, %v96
    %v107 = vmul.bf16 %v31, %v96
    %v108 = vmul.bf16 %v32, %v96
    %v109 = vmul.bf16 %v33, %v96
    %v110 = vmul.bf16 %v34, %v96
    %v111 = vmul.bf16 %v35, %v96
    %v112 = vmul.bf16 %v36, %v96
    %v113 = vmul.bf16 %v37, %v96
    %v114 = vmul.bf16 %v38, %v96
    %v115 = vmul.bf16 %v39, %v96
    %v116 = vmul.bf16 %v40, %v96
    %v117 = vmul.bf16 %v41, %v96
    %v118 = vmul.bf16 %v42, %v96
    %v119 = vmul.bf16 %v43, %v96
    %v120 = vmul.bf16 %v44, %v96
    %v121 = vmul.bf16 %v45, %v96
    %v122 = vmul.bf16 %v46, %v96
    %v123 = vmul.bf16 %v47, %v96
    %v124 = vmul.bf16 %v48, %v96
    %v125 = vmul.bf16 %v49, %v96
    %v126 = vmul.bf16 %v50, %v96
    %v127 = vmul.bf16 %v51, %v96
    %v128 = vmul.bf16 %v52, %v96
    %v129 = vmul.bf16 %v53, %v96
    %v130 = vmul.bf16 %v54, %v96
    %v131 = vmul.bf16 %v55, %v96
    %v132 = vmul.bf16 %v56, %v96
    %v133 = vmul.bf16 %v57, %v96
    %v134 = vmul.bf16 %v58, %v96
    %v135 = vmul.bf16 %v59, %v96
    %v136 = vmul.bf16 %v60, %v96
    %v137 = vmul.bf16 %v61, %v96
    %v138 = vmul.bf16 %v62, %v96
    %v139 = vmul.bf16 %v63, %v96
    %v140 = vmul.bf16 %v64, %v96
    %v141 = vmul.bf16 %v65, %v96
    %v142 = vmul.bf16 %v66, %v96
    %v143 = vmul.bf16 %v67, %v96
    %v144 = vmul.bf16 %v68, %v96
    %v145 = vmul.bf16 %v69, %v96
    %v146 = vmul.bf16 %v70, %v96
    %v147 = vmul.bf16 %v71, %v96
    %v148 = vmul.bf16 %v72, %v96
    %v149 = vmul.bf16 %v73, %v96
    %v150 = vmul.bf16 %v74, %v96
    %v151 = vmul.bf16 %v75, %v96
    %v152 = vmul.bf16 %v76, %v96
    %v153 = vmul.bf16 %v77, %v96
    %v154 = vmul.bf16 %v78, %v96
    %v155 = vmul.bf16 %v79, %v96
    %v156 = vmul.bf16 %v80, %v96
    %v157 = vmul.bf16 %v81, %v96
    %v158 = vmul.bf16 %v82, %v96
    %v159 = vmul.bf16 %v83, %v96
    %v160 = vmul.bf16 %v84, %v96
    %v161 = vmul.bf16 %v85, %v96
    %v162 = vld [vmem:[%s2] sm:$0x1]
    %v164 = vpack.i.b16 %v162, %v162
    %v166 = vlaneseq
    %v167 = vshrl.u32 %v166, 7
    %v168 = vsub.s32 0, %v167
    %v169 = vrot.slane %v164, %v168
    %v171 = vunpack.c.l.b16 %v169
    %v172 = vpack.c.b16 %v171, %v171
    %v174 = vadd.bf16 %v98, %v172
    %v175 = vadd.bf16 %v99, %v172
    %v176 = vadd.bf16 %v100, %v172
    %v177 = vadd.bf16 %v101, %v172
    %v178 = vadd.bf16 %v102, %v172
    %v179 = vadd.bf16 %v103, %v172
    %v180 = vadd.bf16 %v104, %v172
    %v181 = vadd.bf16 %v105, %v172
    %v182 = vadd.bf16 %v106, %v172
    %v183 = vadd.bf16 %v107, %v172
    %v184 = vadd.bf16 %v108, %v172
    %v185 = vadd.bf16 %v109, %v172
    %v186 = vadd.bf16 %v110, %v172
    %v187 = vadd.bf16 %v111, %v172
    %v188 = vadd.bf16 %v112, %v172
    %v189 = vadd.bf16 %v113, %v172
    %v190 = vadd.bf16 %v114, %v172
    %v191 = vadd.bf16 %v115, %v172
    %v192 = vadd.bf16 %v116, %v172
    %v193 = vadd.bf16 %v117, %v172
    %v194 = vadd.bf16 %v118, %v172
    %v195 = vadd.bf16 %v119, %v172
    %v196 = vadd.bf16 %v120, %v172
    %v197 = vadd.bf16 %v121, %v172
    %v198 = vadd.bf16 %v122, %v172
    %v199 = vadd.bf16 %v123, %v172
    %v200 = vadd.bf16 %v124, %v172
    %v201 = vadd.bf16 %v125, %v172
    %v202 = vadd.bf16 %v126, %v172
    %v203 = vadd.bf16 %v127, %v172
    %v204 = vadd.bf16 %v128, %v172
    %v205 = vadd.bf16 %v129, %v172
    %v206 = vadd.bf16 %v130, %v172
    %v207 = vadd.bf16 %v131, %v172
    %v208 = vadd.bf16 %v132, %v172
    %v209 = vadd.bf16 %v133, %v172
    %v210 = vadd.bf16 %v134, %v172
    %v211 = vadd.bf16 %v135, %v172
    %v212 = vadd.bf16 %v136, %v172
    %v213 = vadd.bf16 %v137, %v172
    %v214 = vadd.bf16 %v138, %v172
    %v215 = vadd.bf16 %v139, %v172
    %v216 = vadd.bf16 %v140, %v172
    %v217 = vadd.bf16 %v141, %v172
    %v218 = vadd.bf16 %v142, %v172
    %v219 = vadd.bf16 %v143, %v172
    %v220 = vadd.bf16 %v144, %v172
    %v221 = vadd.bf16 %v145, %v172
    %v222 = vadd.bf16 %v146, %v172
    %v223 = vadd.bf16 %v147, %v172
    %v224 = vadd.bf16 %v148, %v172
    %v225 = vadd.bf16 %v149, %v172
    %v226 = vadd.bf16 %v150, %v172
    %v227 = vadd.bf16 %v151, %v172
    %v228 = vadd.bf16 %v152, %v172
    %v229 = vadd.bf16 %v153, %v172
    %v230 = vadd.bf16 %v154, %v172
    %v231 = vadd.bf16 %v155, %v172
    %v232 = vadd.bf16 %v156, %v172
    %v233 = vadd.bf16 %v157, %v172
    %v234 = vadd.bf16 %v158, %v172
    %v235 = vadd.bf16 %v159, %v172
    %v236 = vadd.bf16 %v160, %v172
    %v237 = vadd.bf16 %v161, %v172
    %v238 = vmax.bf16 %v174, 0
    %v239 = vmax.bf16 %v175, 0
    %v240 = vmax.bf16 %v176, 0
    %v241 = vmax.bf16 %v177, 0
    %v242 = vmax.bf16 %v178, 0
    %v243 = vmax.bf16 %v179, 0
    %v244 = vmax.bf16 %v180, 0
    %v245 = vmax.bf16 %v181, 0
    %v246 = vmax.bf16 %v182, 0
    %v247 = vmax.bf16 %v183, 0
    %v248 = vmax.bf16 %v184, 0
    %v249 = vmax.bf16 %v185, 0
    %v250 = vmax.bf16 %v186, 0
    %v251 = vmax.bf16 %v187, 0
    %v252 = vmax.bf16 %v188, 0
    %v253 = vmax.bf16 %v189, 0
    %v254 = vmax.bf16 %v190, 0
    %v255 = vmax.bf16 %v191, 0
    %v256 = vmax.bf16 %v192, 0
    %v257 = vmax.bf16 %v193, 0
    %v258 = vmax.bf16 %v194, 0
    %v259 = vmax.bf16 %v195, 0
    %v260 = vmax.bf16 %v196, 0
    %v261 = vmax.bf16 %v197, 0
    %v262 = vmax.bf16 %v198, 0
    %v263 = vmax.bf16 %v199, 0
    %v264 = vmax.bf16 %v200, 0
    %v265 = vmax.bf16 %v201, 0
    %v266 = vmax.bf16 %v202, 0
    %v267 = vmax.bf16 %v203, 0
    %v268 = vmax.bf16 %v204, 0
    %v269 = vmax.bf16 %v205, 0
    %v270 = vmax.bf16 %v206, 0
    %v271 = vmax.bf16 %v207, 0
    %v272 = vmax.bf16 %v208, 0
    %v273 = vmax.bf16 %v209, 0
    %v274 = vmax.bf16 %v210, 0
    %v275 = vmax.bf16 %v211, 0
    %v276 = vmax.bf16 %v212, 0
    %v277 = vmax.bf16 %v213, 0
    %v278 = vmax.bf16 %v214, 0
    %v279 = vmax.bf16 %v215, 0
    %v280 = vmax.bf16 %v216, 0
    %v281 = vmax.bf16 %v217, 0
    %v282 = vmax.bf16 %v218, 0
    %v283 = vmax.bf16 %v219, 0
    %v284 = vmax.bf16 %v220, 0
    %v285 = vmax.bf16 %v221, 0
    %v286 = vmax.bf16 %v222, 0
    %v287 = vmax.bf16 %v223, 0
    %v288 = vmax.bf16 %v224, 0
    %v289 = vmax.bf16 %v225, 0
    %v290 = vmax.bf16 %v226, 0
    %v291 = vmax.bf16 %v227, 0
    %v292 = vmax.bf16 %v228, 0
    %v293 = vmax.bf16 %v229, 0
    %v294 = vmax.bf16 %v230, 0
    %v295 = vmax.bf16 %v231, 0
    %v296 = vmax.bf16 %v232, 0
    %v297 = vmax.bf16 %v233, 0
    %v298 = vmax.bf16 %v234, 0
    %v299 = vmax.bf16 %v235, 0
    %v300 = vmax.bf16 %v236, 0
    %v301 = vmax.bf16 %v237, 0
    %v302 = vadd.bf16 %v238, %v240
    %v303 = vadd.bf16 %v239, %v241
    %v304 = vadd.bf16 %v242, %v244
    %v305 = vadd.bf16 %v243, %v245
    %v306 = vadd.bf16 %v246, %v248
    %v307 = vadd.bf16 %v247, %v249
    %v308 = vadd.bf16 %v250, %v252
    %v309 = vadd.bf16 %v251, %v253
    %v310 = vadd.bf16 %v254, %v256
    %v311 = vadd.bf16 %v255, %v257
    %v312 = vadd.bf16 %v258, %v260
    %v313 = vadd.bf16 %v259, %v261
    %v314 = vadd.bf16 %v262, %v264
    %v315 = vadd.bf16 %v263, %v265
    %v316 = vadd.bf16 %v266, %v268
    %v317 = vadd.bf16 %v267, %v269
    %v318 = vadd.bf16 %v270, %v272
    %v319 = vadd.bf16 %v271, %v273
    %v320 = vadd.bf16 %v274, %v276
    %v321 = vadd.bf16 %v275, %v277
    %v322 = vadd.bf16 %v278, %v280
    %v323 = vadd.bf16 %v279, %v281
    %v324 = vadd.bf16 %v282, %v284
    %v325 = vadd.bf16 %v283, %v285
    %v326 = vadd.bf16 %v286, %v288
    %v327 = vadd.bf16 %v287, %v289
    %v328 = vadd.bf16 %v290, %v292
    %v329 = vadd.bf16 %v291, %v293
    %v330 = vadd.bf16 %v294, %v296
    %v331 = vadd.bf16 %v295, %v297
    %v332 = vadd.bf16 %v298, %v300
    %v333 = vadd.bf16 %v299, %v301
    %v367 = vunpack.c.l.s4 1966171168
    %v368 = vunpack.c.0.s8 %v367
    %v369 = vlaneseq
    %v370 = vshrl.u32 %v369, 7
    %v371 = vsub.s32 %v368, %v370
    %v372 = vrot.slane %v302, %v371
    %v373 = vcombine.high %v372, %v372
    %v375 = vunpack.c.l.s4 1966171168
    %v376 = vunpack.c.0.s8 %v375
    %v377 = vlaneseq
    %v378 = vshrl.u32 %v377, 7
    %v379 = vsub.s32 %v376, %v378
    %v380 = vrot.slane %v372, %v379
    %v382 = vunpack.c.l.s4 1966171168
    %v383 = vunpack.c.0.s8 %v382
    %v384 = vlaneseq
    %v385 = vshrl.u32 %v384, 7
    %v386 = vsub.s32 %v383, %v385
    %v387 = vrot.slane %v373, %v386
    %v388 = vcombine.high %v380, %v380
    %v389 = vcombine.high %v387, %v387
    %v391 = vunpack.c.l.s4 1966171168
    %v392 = vunpack.c.0.s8 %v391
    %v393 = vlaneseq
    %v394 = vshrl.u32 %v393, 7
    %v395 = vsub.s32 %v392, %v394
    %v396 = vrot.slane %v303, %v395
    %v397 = vcombine.high %v396, %v396
    %v399 = vunpack.c.l.s4 1966171168
    %v400 = vunpack.c.0.s8 %v399
    %v401 = vlaneseq
    %v402 = vshrl.u32 %v401, 7
    %v403 = vsub.s32 %v400, %v402
    %v404 = vrot.slane %v396, %v403
    %v406 = vunpack.c.l.s4 1966171168
    %v407 = vunpack.c.0.s8 %v406
    %v408 = vlaneseq
    %v409 = vshrl.u32 %v408, 7
    %v410 = vsub.s32 %v407, %v409
    %v411 = vrot.slane %v397, %v410
    %v412 = vcombine.high %v404, %v404
    %v413 = vcombine.high %v411, %v411
    %v415 = vunpack.c.l.s4 1966171168
    %v416 = vunpack.c.0.s8 %v415
    %v417 = vlaneseq
    %v418 = vshrl.u32 %v417, 7
    %v419 = vsub.s32 %v416, %v418
    %v420 = vrot.slane %v304, %v419
    %v421 = vcombine.high %v420, %v420
    %v423 = vunpack.c.l.s4 1966171168
    %v424 = vunpack.c.0.s8 %v423
    %v425 = vlaneseq
    %v426 = vshrl.u32 %v425, 7
    %v427 = vsub.s32 %v424, %v426
    %v428 = vrot.slane %v420, %v427
    %v430 = vunpack.c.l.s4 1966171168
    %v431 = vunpack.c.0.s8 %v430
    %v432 = vlaneseq
    %v433 = vshrl.u32 %v432, 7
    %v434 = vsub.s32 %v431, %v433
    %v435 = vrot.slane %v421, %v434
    %v436 = vcombine.high %v428, %v428
    %v437 = vcombine.high %v435, %v435
    %v439 = vunpack.c.l.s4 1966171168
    %v440 = vunpack.c.0.s8 %v439
    %v441 = vlaneseq
    %v442 = vshrl.u32 %v441, 7
    %v443 = vsub.s32 %v440, %v442
    %v444 = vrot.slane %v305, %v443
    %v445 = vcombine.high %v444, %v444
    %v447 = vunpack.c.l.s4 1966171168
    %v448 = vunpack.c.0.s8 %v447
    %v449 = vlaneseq
    %v450 = vshrl.u32 %v449, 7
    %v451 = vsub.s32 %v448, %v450
    %v452 = vrot.slane %v444, %v451
    %v454 = vunpack.c.l.s4 1966171168
    %v455 = vunpack.c.0.s8 %v454
    %v456 = vlaneseq
    %v457 = vshrl.u32 %v456, 7
    %v458 = vsub.s32 %v455, %v457
    %v459 = vrot.slane %v445, %v458
    %v460 = vcombine.high %v452, %v452
    %v461 = vcombine.high %v459, %v459
    %v463 = vunpack.c.l.s4 1966171168
    %v464 = vunpack.c.0.s8 %v463
    %v465 = vlaneseq
    %v466 = vshrl.u32 %v465, 7
    %v467 = vsub.s32 %v464, %v466
    %v468 = vrot.slane %v306, %v467
    %v469 = vcombine.high %v468, %v468
    %v471 = vunpack.c.l.s4 1966171168
    %v472 = vunpack.c.0.s8 %v471
    %v473 = vlaneseq
    %v474 = vshrl.u32 %v473, 7
    %v475 = vsub.s32 %v472, %v474
    %v476 = vrot.slane %v468, %v475
    %v478 = vunpack.c.l.s4 1966171168
    %v479 = vunpack.c.0.s8 %v478
    %v480 = vlaneseq
    %v481 = vshrl.u32 %v480, 7
    %v482 = vsub.s32 %v479, %v481
    %v483 = vrot.slane %v469, %v482
    %v484 = vcombine.high %v476, %v476
    %v485 = vcombine.high %v483, %v483
    %v487 = vunpack.c.l.s4 1966171168
    %v488 = vunpack.c.0.s8 %v487
    %v489 = vlaneseq
    %v490 = vshrl.u32 %v489, 7
    %v491 = vsub.s32 %v488, %v490
    %v492 = vrot.slane %v307, %v491
    %v493 = vcombine.high %v492, %v492
    %v495 = vunpack.c.l.s4 1966171168
    %v496 = vunpack.c.0.s8 %v495
    %v497 = vlaneseq
    %v498 = vshrl.u32 %v497, 7
    %v499 = vsub.s32 %v496, %v498
    %v500 = vrot.slane %v492, %v499
    %v502 = vunpack.c.l.s4 1966171168
    %v503 = vunpack.c.0.s8 %v502
    %v504 = vlaneseq
    %v505 = vshrl.u32 %v504, 7
    %v506 = vsub.s32 %v503, %v505
    %v507 = vrot.slane %v493, %v506
    %v508 = vcombine.high %v500, %v500
    %v509 = vcombine.high %v507, %v507
    %v511 = vunpack.c.l.s4 1966171168
    %v512 = vunpack.c.0.s8 %v511
    %v513 = vlaneseq
    %v514 = vshrl.u32 %v513, 7
    %v515 = vsub.s32 %v512, %v514
    %v516 = vrot.slane %v308, %v515
    %v517 = vcombine.high %v516, %v516
    %v519 = vunpack.c.l.s4 1966171168
    %v520 = vunpack.c.0.s8 %v519
    %v521 = vlaneseq
    %v522 = vshrl.u32 %v521, 7
    %v523 = vsub.s32 %v520, %v522
    %v524 = vrot.slane %v516, %v523
    %v526 = vunpack.c.l.s4 1966171168
    %v527 = vunpack.c.0.s8 %v526
    %v528 = vlaneseq
    %v529 = vshrl.u32 %v528, 7
    %v530 = vsub.s32 %v527, %v529
    %v531 = vrot.slane %v517, %v530
    %v532 = vcombine.high %v524, %v524
    %v533 = vcombine.high %v531, %v531
    %v535 = vunpack.c.l.s4 1966171168
    %v536 = vunpack.c.0.s8 %v535
    %v537 = vlaneseq
    %v538 = vshrl.u32 %v537, 7
    %v539 = vsub.s32 %v536, %v538
    %v540 = vrot.slane %v309, %v539
    %v541 = vcombine.high %v540, %v540
    %v543 = vunpack.c.l.s4 1966171168
    %v544 = vunpack.c.0.s8 %v543
    %v545 = vlaneseq
    %v546 = vshrl.u32 %v545, 7
    %v547 = vsub.s32 %v544, %v546
    %v548 = vrot.slane %v540, %v547
    %v550 = vunpack.c.l.s4 1966171168
    %v551 = vunpack.c.0.s8 %v550
    %v552 = vlaneseq
    %v553 = vshrl.u32 %v552, 7
    %v554 = vsub.s32 %v551, %v553
    %v555 = vrot.slane %v541, %v554
    %v556 = vcombine.high %v548, %v548
    %v557 = vcombine.high %v555, %v555
    %v559 = vunpack.c.l.s4 1966171168
    %v560 = vunpack.c.0.s8 %v559
    %v561 = vlaneseq
    %v562 = vshrl.u32 %v561, 7
    %v563 = vsub.s32 %v560, %v562
    %v564 = vrot.slane %v310, %v563
    %v565 = vcombine.high %v564, %v564
    %v567 = vunpack.c.l.s4 1966171168
    %v568 = vunpack.c.0.s8 %v567
    %v569 = vlaneseq
    %v570 = vshrl.u32 %v569, 7
    %v571 = vsub.s32 %v568, %v570
    %v572 = vrot.slane %v564, %v571
    %v574 = vunpack.c.l.s4 1966171168
    %v575 = vunpack.c.0.s8 %v574
    %v576 = vlaneseq
    %v577 = vshrl.u32 %v576, 7
    %v578 = vsub.s32 %v575, %v577
    %v579 = vrot.slane %v565, %v578
    %v580 = vcombine.high %v572, %v572
    %v581 = vcombine.high %v579, %v579
    %v583 = vunpack.c.l.s4 1966171168
    %v584 = vunpack.c.0.s8 %v583
    %v585 = vlaneseq
    %v586 = vshrl.u32 %v585, 7
    %v587 = vsub.s32 %v584, %v586
    %v588 = vrot.slane %v311, %v587
    %v589 = vcombine.high %v588, %v588
    %v591 = vunpack.c.l.s4 1966171168
    %v592 = vunpack.c.0.s8 %v591
    %v593 = vlaneseq
    %v594 = vshrl.u32 %v593, 7
    %v595 = vsub.s32 %v592, %v594
    %v596 = vrot.slane %v588, %v595
    %v598 = vunpack.c.l.s4 1966171168
    %v599 = vunpack.c.0.s8 %v598
    %v600 = vlaneseq
    %v601 = vshrl.u32 %v600, 7
    %v602 = vsub.s32 %v599, %v601
    %v603 = vrot.slane %v589, %v602
    %v604 = vcombine.high %v596, %v596
    %v605 = vcombine.high %v603, %v603
    %v607 = vunpack.c.l.s4 1966171168
    %v608 = vunpack.c.0.s8 %v607
    %v609 = vlaneseq
    %v610 = vshrl.u32 %v609, 7
    %v611 = vsub.s32 %v608, %v610
    %v612 = vrot.slane %v312, %v611
    %v613 = vcombine.high %v612, %v612
    %v615 = vunpack.c.l.s4 1966171168
    %v616 = vunpack.c.0.s8 %v615
    %v617 = vlaneseq
    %v618 = vshrl.u32 %v617, 7
    %v619 = vsub.s32 %v616, %v618
    %v620 = vrot.slane %v612, %v619
    %v622 = vunpack.c.l.s4 1966171168
    %v623 = vunpack.c.0.s8 %v622
    %v624 = vlaneseq
    %v625 = vshrl.u32 %v624, 7
    %v626 = vsub.s32 %v623, %v625
    %v627 = vrot.slane %v613, %v626
    %v628 = vcombine.high %v620, %v620
    %v629 = vcombine.high %v627, %v627
    %v631 = vunpack.c.l.s4 1966171168
    %v632 = vunpack.c.0.s8 %v631
    %v633 = vlaneseq
    %v634 = vshrl.u32 %v633, 7
    %v635 = vsub.s32 %v632, %v634
    %v636 = vrot.slane %v313, %v635
    %v637 = vcombine.high %v636, %v636
    %v639 = vunpack.c.l.s4 1966171168
    %v640 = vunpack.c.0.s8 %v639
    %v641 = vlaneseq
    %v642 = vshrl.u32 %v641, 7
    %v643 = vsub.s32 %v640, %v642
    %v644 = vrot.slane %v636, %v643
    %v646 = vunpack.c.l.s4 1966171168
    %v647 = vunpack.c.0.s8 %v646
    %v648 = vlaneseq
    %v649 = vshrl.u32 %v648, 7
    %v650 = vsub.s32 %v647, %v649
    %v651 = vrot.slane %v637, %v650
    %v652 = vcombine.high %v644, %v644
    %v653 = vcombine.high %v651, %v651
    %v655 = vunpack.c.l.s4 1966171168
    %v656 = vunpack.c.0.s8 %v655
    %v657 = vlaneseq
    %v658 = vshrl.u32 %v657, 7
    %v659 = vsub.s32 %v656, %v658
    %v660 = vrot.slane %v314, %v659
    %v661 = vcombine.high %v660, %v660
    %v663 = vunpack.c.l.s4 1966171168
    %v664 = vunpack.c.0.s8 %v663
    %v665 = vlaneseq
    %v666 = vshrl.u32 %v665, 7
    %v667 = vsub.s32 %v664, %v666
    %v668 = vrot.slane %v660, %v667
    %v670 = vunpack.c.l.s4 1966171168
    %v671 = vunpack.c.0.s8 %v670
    %v672 = vlaneseq
    %v673 = vshrl.u32 %v672, 7
    %v674 = vsub.s32 %v671, %v673
    %v675 = vrot.slane %v661, %v674
    %v676 = vcombine.high %v668, %v668
    %v677 = vcombine.high %v675, %v675
    %v679 = vunpack.c.l.s4 1966171168
    %v680 = vunpack.c.0.s8 %v679
    %v681 = vlaneseq
    %v682 = vshrl.u32 %v681, 7
    %v683 = vsub.s32 %v680, %v682
    %v684 = vrot.slane %v315, %v683
    %v685 = vcombine.high %v684, %v684
    %v687 = vunpack.c.l.s4 1966171168
    %v688 = vunpack.c.0.s8 %v687
    %v689 = vlaneseq
    %v690 = vshrl.u32 %v689, 7
    %v691 = vsub.s32 %v688, %v690
    %v692 = vrot.slane %v684, %v691
    %v694 = vunpack.c.l.s4 1966171168
    %v695 = vunpack.c.0.s8 %v694
    %v696 = vlaneseq
    %v697 = vshrl.u32 %v696, 7
    %v698 = vsub.s32 %v695, %v697
    %v699 = vrot.slane %v685, %v698
    %v700 = vcombine.high %v692, %v692
    %v701 = vcombine.high %v699, %v699
    %v703 = vunpack.c.l.s4 1966171168
    %v704 = vunpack.c.0.s8 %v703
    %v705 = vlaneseq
    %v706 = vshrl.u32 %v705, 7
    %v707 = vsub.s32 %v704, %v706
    %v708 = vrot.slane %v316, %v707
    %v709 = vcombine.high %v708, %v708
    %v711 = vunpack.c.l.s4 1966171168
    %v712 = vunpack.c.0.s8 %v711
    %v713 = vlaneseq
    %v714 = vshrl.u32 %v713, 7
    %v715 = vsub.s32 %v712, %v714
    %v716 = vrot.slane %v708, %v715
    %v718 = vunpack.c.l.s4 1966171168
    %v719 = vunpack.c.0.s8 %v718
    %v720 = vlaneseq
    %v721 = vshrl.u32 %v720, 7
    %v722 = vsub.s32 %v719, %v721
    %v723 = vrot.slane %v709, %v722
    %v724 = vcombine.high %v716, %v716
    %v725 = vcombine.high %v723, %v723
    %v727 = vunpack.c.l.s4 1966171168
    %v728 = vunpack.c.0.s8 %v727
    %v729 = vlaneseq
    %v730 = vshrl.u32 %v729, 7
    %v731 = vsub.s32 %v728, %v730
    %v732 = vrot.slane %v317, %v731
    %v733 = vcombine.high %v732, %v732
    %v735 = vunpack.c.l.s4 1966171168
    %v736 = vunpack.c.0.s8 %v735
    %v737 = vlaneseq
    %v738 = vshrl.u32 %v737, 7
    %v739 = vsub.s32 %v736, %v738
    %v740 = vrot.slane %v732, %v739
    %v742 = vunpack.c.l.s4 1966171168
    %v743 = vunpack.c.0.s8 %v742
    %v744 = vlaneseq
    %v745 = vshrl.u32 %v744, 7
    %v746 = vsub.s32 %v743, %v745
    %v747 = vrot.slane %v733, %v746
    %v748 = vcombine.high %v740, %v740
    %v749 = vcombine.high %v747, %v747
    %v751 = vunpack.c.l.s4 1966171168
    %v752 = vunpack.c.0.s8 %v751
    %v753 = vlaneseq
    %v754 = vshrl.u32 %v753, 7
    %v755 = vsub.s32 %v752, %v754
    %v756 = vrot.slane %v318, %v755
    %v757 = vcombine.high %v756, %v756
    %v759 = vunpack.c.l.s4 1966171168
    %v760 = vunpack.c.0.s8 %v759
    %v761 = vlaneseq
    %v762 = vshrl.u32 %v761, 7
    %v763 = vsub.s32 %v760, %v762
    %v764 = vrot.slane %v756, %v763
    %v766 = vunpack.c.l.s4 1966171168
    %v767 = vunpack.c.0.s8 %v766
    %v768 = vlaneseq
    %v769 = vshrl.u32 %v768, 7
    %v770 = vsub.s32 %v767, %v769
    %v771 = vrot.slane %v757, %v770
    %v772 = vcombine.high %v764, %v764
    %v773 = vcombine.high %v771, %v771
    %v775 = vunpack.c.l.s4 1966171168
    %v776 = vunpack.c.0.s8 %v775
    %v777 = vlaneseq
    %v778 = vshrl.u32 %v777, 7
    %v779 = vsub.s32 %v776, %v778
    %v780 = vrot.slane %v319, %v779
    %v781 = vcombine.high %v780, %v780
    %v783 = vunpack.c.l.s4 1966171168
    %v784 = vunpack.c.0.s8 %v783
    %v785 = vlaneseq
    %v786 = vshrl.u32 %v785, 7
    %v787 = vsub.s32 %v784, %v786
    %v788 = vrot.slane %v780, %v787
    %v790 = vunpack.c.l.s4 1966171168
    %v791 = vunpack.c.0.s8 %v790
    %v792 = vlaneseq
    %v793 = vshrl.u32 %v792, 7
    %v794 = vsub.s32 %v791, %v793
    %v795 = vrot.slane %v781, %v794
    %v796 = vcombine.high %v788, %v788
    %v797 = vcombine.high %v795, %v795
    %v799 = vunpack.c.l.s4 1966171168
    %v800 = vunpack.c.0.s8 %v799
    %v801 = vlaneseq
    %v802 = vshrl.u32 %v801, 7
    %v803 = vsub.s32 %v800, %v802
    %v804 = vrot.slane %v320, %v803
    %v805 = vcombine.high %v804, %v804
    %v807 = vunpack.c.l.s4 1966171168
    %v808 = vunpack.c.0.s8 %v807
    %v809 = vlaneseq
    %v810 = vshrl.u32 %v809, 7
    %v811 = vsub.s32 %v808, %v810
    %v812 = vrot.slane %v804, %v811
    %v814 = vunpack.c.l.s4 1966171168
    %v815 = vunpack.c.0.s8 %v814
    %v816 = vlaneseq
    %v817 = vshrl.u32 %v816, 7
    %v818 = vsub.s32 %v815, %v817
    %v819 = vrot.slane %v805, %v818
    %v820 = vcombine.high %v812, %v812
    %v821 = vcombine.high %v819, %v819
    %v823 = vunpack.c.l.s4 1966171168
    %v824 = vunpack.c.0.s8 %v823
    %v825 = vlaneseq
    %v826 = vshrl.u32 %v825, 7
    %v827 = vsub.s32 %v824, %v826
    %v828 = vrot.slane %v321, %v827
    %v829 = vcombine.high %v828, %v828
    %v831 = vunpack.c.l.s4 1966171168
    %v832 = vunpack.c.0.s8 %v831
    %v833 = vlaneseq
    %v834 = vshrl.u32 %v833, 7
    %v835 = vsub.s32 %v832, %v834
    %v836 = vrot.slane %v828, %v835
    %v838 = vunpack.c.l.s4 1966171168
    %v839 = vunpack.c.0.s8 %v838
    %v840 = vlaneseq
    %v841 = vshrl.u32 %v840, 7
    %v842 = vsub.s32 %v839, %v841
    %v843 = vrot.slane %v829, %v842
    %v844 = vcombine.high %v836, %v836
    %v845 = vcombine.high %v843, %v843
    %v847 = vunpack.c.l.s4 1966171168
    %v848 = vunpack.c.0.s8 %v847
    %v849 = vlaneseq
    %v850 = vshrl.u32 %v849, 7
    %v851 = vsub.s32 %v848, %v850
    %v852 = vrot.slane %v322, %v851
    %v853 = vcombine.high %v852, %v852
    %v855 = vunpack.c.l.s4 1966171168
    %v856 = vunpack.c.0.s8 %v855
    %v857 = vlaneseq
    %v858 = vshrl.u32 %v857, 7
    %v859 = vsub.s32 %v856, %v858
    %v860 = vrot.slane %v852, %v859
    %v862 = vunpack.c.l.s4 1966171168
    %v863 = vunpack.c.0.s8 %v862
    %v864 = vlaneseq
    %v865 = vshrl.u32 %v864, 7
    %v866 = vsub.s32 %v863, %v865
    %v867 = vrot.slane %v853, %v866
    %v868 = vcombine.high %v860, %v860
    %v869 = vcombine.high %v867, %v867
    %v871 = vunpack.c.l.s4 1966171168
    %v872 = vunpack.c.0.s8 %v871
    %v873 = vlaneseq
    %v874 = vshrl.u32 %v873, 7
    %v875 = vsub.s32 %v872, %v874
    %v876 = vrot.slane %v323, %v875
    %v877 = vcombine.high %v876, %v876
    %v879 = vunpack.c.l.s4 1966171168
    %v880 = vunpack.c.0.s8 %v879
    %v881 = vlaneseq
    %v882 = vshrl.u32 %v881, 7
    %v883 = vsub.s32 %v880, %v882
    %v884 = vrot.slane %v876, %v883
    %v886 = vunpack.c.l.s4 1966171168
    %v887 = vunpack.c.0.s8 %v886
    %v888 = vlaneseq
    %v889 = vshrl.u32 %v888, 7
    %v890 = vsub.s32 %v887, %v889
    %v891 = vrot.slane %v877, %v890
    %v892 = vcombine.high %v884, %v884
    %v893 = vcombine.high %v891, %v891
    %v895 = vunpack.c.l.s4 1966171168
    %v896 = vunpack.c.0.s8 %v895
    %v897 = vlaneseq
    %v898 = vshrl.u32 %v897, 7
    %v899 = vsub.s32 %v896, %v898
    %v900 = vrot.slane %v324, %v899
    %v901 = vcombine.high %v900, %v900
    %v903 = vunpack.c.l.s4 1966171168
    %v904 = vunpack.c.0.s8 %v903
    %v905 = vlaneseq
    %v906 = vshrl.u32 %v905, 7
    %v907 = vsub.s32 %v904, %v906
    %v908 = vrot.slane %v900, %v907
    %v910 = vunpack.c.l.s4 1966171168
    %v911 = vunpack.c.0.s8 %v910
    %v912 = vlaneseq
    %v913 = vshrl.u32 %v912, 7
    %v914 = vsub.s32 %v911, %v913
    %v915 = vrot.slane %v901, %v914
    %v916 = vcombine.high %v908, %v908
    %v917 = vcombine.high %v915, %v915
    %v919 = vunpack.c.l.s4 1966171168
    %v920 = vunpack.c.0.s8 %v919
    %v921 = vlaneseq
    %v922 = vshrl.u32 %v921, 7
    %v923 = vsub.s32 %v920, %v922
    %v924 = vrot.slane %v325, %v923
    %v925 = vcombine.high %v924, %v924
    %v927 = vunpack.c.l.s4 1966171168
    %v928 = vunpack.c.0.s8 %v927
    %v929 = vlaneseq
    %v930 = vshrl.u32 %v929, 7
    %v931 = vsub.s32 %v928, %v930
    %v932 = vrot.slane %v924, %v931
    %v934 = vunpack.c.l.s4 1966171168
    %v935 = vunpack.c.0.s8 %v934
    %v936 = vlaneseq
    %v937 = vshrl.u32 %v936, 7
    %v938 = vsub.s32 %v935, %v937
    %v939 = vrot.slane %v925, %v938
    %v940 = vcombine.high %v932, %v932
    %v941 = vcombine.high %v939, %v939
    %v943 = vunpack.c.l.s4 1966171168
    %v944 = vunpack.c.0.s8 %v943
    %v945 = vlaneseq
    %v946 = vshrl.u32 %v945, 7
    %v947 = vsub.s32 %v944, %v946
    %v948 = vrot.slane %v326, %v947
    %v949 = vcombine.high %v948, %v948
    %v951 = vunpack.c.l.s4 1966171168
    %v952 = vunpack.c.0.s8 %v951
    %v953 = vlaneseq
    %v954 = vshrl.u32 %v953, 7
    %v955 = vsub.s32 %v952, %v954
    %v956 = vrot.slane %v948, %v955
    %v958 = vunpack.c.l.s4 1966171168
    %v959 = vunpack.c.0.s8 %v958
    %v960 = vlaneseq
    %v961 = vshrl.u32 %v960, 7
    %v962 = vsub.s32 %v959, %v961
    %v963 = vrot.slane %v949, %v962
    %v964 = vcombine.high %v956, %v956
    %v965 = vcombine.high %v963, %v963
    %v967 = vunpack.c.l.s4 1966171168
    %v968 = vunpack.c.0.s8 %v967
    %v969 = vlaneseq
    %v970 = vshrl.u32 %v969, 7
    %v971 = vsub.s32 %v968, %v970
    %v972 = vrot.slane %v327, %v971
    %v973 = vcombine.high %v972, %v972
    %v975 = vunpack.c.l.s4 1966171168
    %v976 = vunpack.c.0.s8 %v975
    %v977 = vlaneseq
    %v978 = vshrl.u32 %v977, 7
    %v979 = vsub.s32 %v976, %v978
    %v980 = vrot.slane %v972, %v979
    %v982 = vunpack.c.l.s4 1966171168
    %v983 = vunpack.c.0.s8 %v982
    %v984 = vlaneseq
    %v985 = vshrl.u32 %v984, 7
    %v986 = vsub.s32 %v983, %v985
    %v987 = vrot.slane %v973, %v986
    %v988 = vcombine.high %v980, %v980
    %v989 = vcombine.high %v987, %v987
    %v991 = vunpack.c.l.s4 1966171168
    %v992 = vunpack.c.0.s8 %v991
    %v993 = vlaneseq
    %v994 = vshrl.u32 %v993, 7
    %v995 = vsub.s32 %v992, %v994
    %v996 = vrot.slane %v328, %v995
    %v997 = vcombine.high %v996, %v996
    %v999 = vunpack.c.l.s4 1966171168
    %v1000 = vunpack.c.0.s8 %v999
    %v1001 = vlaneseq
    %v1002 = vshrl.u32 %v1001, 7
    %v1003 = vsub.s32 %v1000, %v1002
    %v1004 = vrot.slane %v996, %v1003
    %v1006 = vunpack.c.l.s4 1966171168
    %v1007 = vunpack.c.0.s8 %v1006
    %v1008 = vlaneseq
    %v1009 = vshrl.u32 %v1008, 7
    %v1010 = vsub.s32 %v1007, %v1009
    %v1011 = vrot.slane %v997, %v1010
    %v1012 = vcombine.high %v1004, %v1004
    %v1013 = vcombine.high %v1011, %v1011
    %v1015 = vunpack.c.l.s4 1966171168
    %v1016 = vunpack.c.0.s8 %v1015
    %v1017 = vlaneseq
    %v1018 = vshrl.u32 %v1017, 7
    %v1019 = vsub.s32 %v1016, %v1018
    %v1020 = vrot.slane %v329, %v1019
    %v1021 = vcombine.high %v1020, %v1020
    %v1023 = vunpack.c.l.s4 1966171168
    %v1024 = vunpack.c.0.s8 %v1023
    %v1025 = vlaneseq
    %v1026 = vshrl.u32 %v1025, 7
    %v1027 = vsub.s32 %v1024, %v1026
    %v1028 = vrot.slane %v1020, %v1027
    %v1030 = vunpack.c.l.s4 1966171168
    %v1031 = vunpack.c.0.s8 %v1030
    %v1032 = vlaneseq
    %v1033 = vshrl.u32 %v1032, 7
    %v1034 = vsub.s32 %v1031, %v1033
    %v1035 = vrot.slane %v1021, %v1034
    %v1036 = vcombine.high %v1028, %v1028
    %v1037 = vcombine.high %v1035, %v1035
    %v1039 = vunpack.c.l.s4 1966171168
    %v1040 = vunpack.c.0.s8 %v1039
    %v1041 = vlaneseq
    %v1042 = vshrl.u32 %v1041, 7
    %v1043 = vsub.s32 %v1040, %v1042
    %v1044 = vrot.slane %v330, %v1043
    %v1045 = vcombine.high %v1044, %v1044
    %v1047 = vunpack.c.l.s4 1966171168
    %v1048 = vunpack.c.0.s8 %v1047
    %v1049 = vlaneseq
    %v1050 = vshrl.u32 %v1049, 7
    %v1051 = vsub.s32 %v1048, %v1050
    %v1052 = vrot.slane %v1044, %v1051
    %v1054 = vunpack.c.l.s4 1966171168
    %v1055 = vunpack.c.0.s8 %v1054
    %v1056 = vlaneseq
    %v1057 = vshrl.u32 %v1056, 7
    %v1058 = vsub.s32 %v1055, %v1057
    %v1059 = vrot.slane %v1045, %v1058
    %v1060 = vcombine.high %v1052, %v1052
    %v1061 = vcombine.high %v1059, %v1059
    %v1063 = vunpack.c.l.s4 1966171168
    %v1064 = vunpack.c.0.s8 %v1063
    %v1065 = vlaneseq
    %v1066 = vshrl.u32 %v1065, 7
    %v1067 = vsub.s32 %v1064, %v1066
    %v1068 = vrot.slane %v331, %v1067
    %v1069 = vcombine.high %v1068, %v1068
    %v1071 = vunpack.c.l.s4 1966171168
    %v1072 = vunpack.c.0.s8 %v1071
    %v1073 = vlaneseq
    %v1074 = vshrl.u32 %v1073, 7
    %v1075 = vsub.s32 %v1072, %v1074
    %v1076 = vrot.slane %v1068, %v1075
    %v1078 = vunpack.c.l.s4 1966171168
    %v1079 = vunpack.c.0.s8 %v1078
    %v1080 = vlaneseq
    %v1081 = vshrl.u32 %v1080, 7
    %v1082 = vsub.s32 %v1079, %v1081
    %v1083 = vrot.slane %v1069, %v1082
    %v1084 = vcombine.high %v1076, %v1076
    %v1085 = vcombine.high %v1083, %v1083
    %v1087 = vunpack.c.l.s4 1966171168
    %v1088 = vunpack.c.0.s8 %v1087
    %v1089 = vlaneseq
    %v1090 = vshrl.u32 %v1089, 7
    %v1091 = vsub.s32 %v1088, %v1090
    %v1092 = vrot.slane %v332, %v1091
    %v1093 = vcombine.high %v1092, %v1092
    %v1095 = vunpack.c.l.s4 1966171168
    %v1096 = vunpack.c.0.s8 %v1095
    %v1097 = vlaneseq
    %v1098 = vshrl.u32 %v1097, 7
    %v1099 = vsub.s32 %v1096, %v1098
    %v1100 = vrot.slane %v1092, %v1099
    %v1102 = vunpack.c.l.s4 1966171168
    %v1103 = vunpack.c.0.s8 %v1102
    %v1104 = vlaneseq
    %v1105 = vshrl.u32 %v1104, 7
    %v1106 = vsub.s32 %v1103, %v1105
    %v1107 = vrot.slane %v1093, %v1106
    %v1108 = vcombine.high %v1100, %v1100
    %v1109 = vcombine.high %v1107, %v1107
    %v1111 = vunpack.c.l.s4 1966171168
    %v1112 = vunpack.c.0.s8 %v1111
    %v1113 = vlaneseq
    %v1114 = vshrl.u32 %v1113, 7
    %v1115 = vsub.s32 %v1112, %v1114
    %v1116 = vrot.slane %v333, %v1115
    %v1117 = vcombine.high %v1116, %v1116
    %v1119 = vunpack.c.l.s4 1966171168
    %v1120 = vunpack.c.0.s8 %v1119
    %v1121 = vlaneseq
    %v1122 = vshrl.u32 %v1121, 7
    %v1123 = vsub.s32 %v1120, %v1122
    %v1124 = vrot.slane %v1116, %v1123
    %v1126 = vunpack.c.l.s4 1966171168
    %v1127 = vunpack.c.0.s8 %v1126
    %v1128 = vlaneseq
    %v1129 = vshrl.u32 %v1128, 7
    %v1130 = vsub.s32 %v1127, %v1129
    %v1131 = vrot.slane %v1117, %v1130
    %v1132 = vcombine.high %v1124, %v1124
    %v1133 = vcombine.high %v1131, %v1131
    %v1262 = vunpack.c.l.bf16 %v380
    %v1263 = vunpack.c.l.bf16 %v387
    %v1264 = vunpack.c.l.bf16 %v388
    %v1265 = vunpack.c.l.bf16 %v389
    %v1266 = vunpack.c.l.bf16 %v404
    %v1267 = vunpack.c.l.bf16 %v411
    %v1268 = vunpack.c.l.bf16 %v412
    %v1269 = vunpack.c.l.bf16 %v413
    %v1270 = vunpack.c.l.bf16 %v428
    %v1271 = vunpack.c.l.bf16 %v435
    %v1272 = vunpack.c.l.bf16 %v436
    %v1273 = vunpack.c.l.bf16 %v437
    %v1274 = vunpack.c.l.bf16 %v452
    %v1275 = vunpack.c.l.bf16 %v459
    %v1276 = vunpack.c.l.bf16 %v460
    %v1277 = vunpack.c.l.bf16 %v461
    %v1278 = vunpack.c.l.bf16 %v476
    %v1279 = vunpack.c.l.bf16 %v483
    %v1280 = vunpack.c.l.bf16 %v484
    %v1281 = vunpack.c.l.bf16 %v485
    %v1282 = vunpack.c.l.bf16 %v500
    %v1283 = vunpack.c.l.bf16 %v507
    %v1284 = vunpack.c.l.bf16 %v508
    %v1285 = vunpack.c.l.bf16 %v509
    %v1286 = vunpack.c.l.bf16 %v524
    %v1287 = vunpack.c.l.bf16 %v531
    %v1288 = vunpack.c.l.bf16 %v532
    %v1289 = vunpack.c.l.bf16 %v533
    %v1290 = vunpack.c.l.bf16 %v548
    %v1291 = vunpack.c.l.bf16 %v555
    %v1292 = vunpack.c.l.bf16 %v556
    %v1293 = vunpack.c.l.bf16 %v557
    %v1294 = vunpack.c.l.bf16 %v572
    %v1295 = vunpack.c.l.bf16 %v579
    %v1296 = vunpack.c.l.bf16 %v580
    %v1297 = vunpack.c.l.bf16 %v581
    %v1298 = vunpack.c.l.bf16 %v596
    %v1299 = vunpack.c.l.bf16 %v603
    %v1300 = vunpack.c.l.bf16 %v604
    %v1301 = vunpack.c.l.bf16 %v605
    %v1302 = vunpack.c.l.bf16 %v620
    %v1303 = vunpack.c.l.bf16 %v627
    %v1304 = vunpack.c.l.bf16 %v628
    %v1305 = vunpack.c.l.bf16 %v629
    %v1306 = vunpack.c.l.bf16 %v644
    %v1307 = vunpack.c.l.bf16 %v651
    %v1308 = vunpack.c.l.bf16 %v652
    %v1309 = vunpack.c.l.bf16 %v653
    %v1310 = vunpack.c.l.bf16 %v668
    %v1311 = vunpack.c.l.bf16 %v675
    %v1312 = vunpack.c.l.bf16 %v676
    %v1313 = vunpack.c.l.bf16 %v677
    %v1314 = vunpack.c.l.bf16 %v692
    %v1315 = vunpack.c.l.bf16 %v699
    %v1316 = vunpack.c.l.bf16 %v700
    %v1317 = vunpack.c.l.bf16 %v701
    %v1318 = vunpack.c.l.bf16 %v716
    %v1319 = vunpack.c.l.bf16 %v723
    %v1320 = vunpack.c.l.bf16 %v724
    %v1321 = vunpack.c.l.bf16 %v725
    %v1322 = vunpack.c.l.bf16 %v740
    %v1323 = vunpack.c.l.bf16 %v747
    %v1324 = vunpack.c.l.bf16 %v748
    %v1325 = vunpack.c.l.bf16 %v749
    %v1326 = vunpack.c.l.bf16 %v764
    %v1327 = vunpack.c.l.bf16 %v771
    %v1328 = vunpack.c.l.bf16 %v772
    %v1329 = vunpack.c.l.bf16 %v773
    %v1330 = vunpack.c.l.bf16 %v788
    %v1331 = vunpack.c.l.bf16 %v795
    %v1332 = vunpack.c.l.bf16 %v796
    %v1333 = vunpack.c.l.bf16 %v797
    %v1334 = vunpack.c.l.bf16 %v812
    %v1335 = vunpack.c.l.bf16 %v819
    %v1336 = vunpack.c.l.bf16 %v820
    %v1337 = vunpack.c.l.bf16 %v821
    %v1338 = vunpack.c.l.bf16 %v836
    %v1339 = vunpack.c.l.bf16 %v843
    %v1340 = vunpack.c.l.bf16 %v844
    %v1341 = vunpack.c.l.bf16 %v845
    %v1342 = vunpack.c.l.bf16 %v860
    %v1343 = vunpack.c.l.bf16 %v867
    %v1344 = vunpack.c.l.bf16 %v868
    %v1345 = vunpack.c.l.bf16 %v869
    %v1346 = vunpack.c.l.bf16 %v884
    %v1347 = vunpack.c.l.bf16 %v891
    %v1348 = vunpack.c.l.bf16 %v892
    %v1349 = vunpack.c.l.bf16 %v893
    %v1350 = vunpack.c.l.bf16 %v908
    %v1351 = vunpack.c.l.bf16 %v915
    %v1352 = vunpack.c.l.bf16 %v916
    %v1353 = vunpack.c.l.bf16 %v917
    %v1354 = vunpack.c.l.bf16 %v932
    %v1355 = vunpack.c.l.bf16 %v939
    %v1356 = vunpack.c.l.bf16 %v940
    %v1357 = vunpack.c.l.bf16 %v941
    %v1358 = vunpack.c.l.bf16 %v956
    %v1359 = vunpack.c.l.bf16 %v963
    %v1360 = vunpack.c.l.bf16 %v964
    %v1361 = vunpack.c.l.bf16 %v965
    %v1362 = vunpack.c.l.bf16 %v980
    %v1363 = vunpack.c.l.bf16 %v987
    %v1364 = vunpack.c.l.bf16 %v988
    %v1365 = vunpack.c.l.bf16 %v989
    %v1366 = vunpack.c.l.bf16 %v1004
    %v1367 = vunpack.c.l.bf16 %v1011
    %v1368 = vunpack.c.l.bf16 %v1012
    %v1369 = vunpack.c.l.bf16 %v1013
    %v1370 = vunpack.c.l.bf16 %v1028
    %v1371 = vunpack.c.l.bf16 %v1035
    %v1372 = vunpack.c.l.bf16 %v1036
    %v1373 = vunpack.c.l.bf16 %v1037
    %v1374 = vunpack.c.l.bf16 %v1052
    %v1375 = vunpack.c.l.bf16 %v1059
    %v1376 = vunpack.c.l.bf16 %v1060
    %v1377 = vunpack.c.l.bf16 %v1061
    %v1378 = vunpack.c.l.bf16 %v1076
    %v1379 = vunpack.c.l.bf16 %v1083
    %v1380 = vunpack.c.l.bf16 %v1084
    %v1381 = vunpack.c.l.bf16 %v1085
    %v1382 = vunpack.c.l.bf16 %v1100
    %v1383 = vunpack.c.l.bf16 %v1107
    %v1384 = vunpack.c.l.bf16 %v1108
    %v1385 = vunpack.c.l.bf16 %v1109
    %v1386 = vunpack.c.l.bf16 %v1124
    %v1387 = vunpack.c.l.bf16 %v1131
    %v1388 = vunpack.c.l.bf16 %v1132
    %v1389 = vunpack.c.l.bf16 %v1133
    %vm1390 = vcmask 58368
    %v1391 = vsel %vm1390, %v1262, 0.0
    %v1392 = vrot.slane %v1391, 4
    %v1393 = vadd.f32 %v1391, %v1392
    %v1394 = vrot.slane %v1393, 2
    %v1395 = vadd.f32 %v1393, %v1394
    %v1396 = vrot.slane %v1395, 1
    %v1397 = vadd.f32 %v1395, %v1396
    %v1398 = vsel %vm1390, %v1263, 0.0
    %v1399 = vrot.slane %v1398, 4
    %v1400 = vadd.f32 %v1398, %v1399
    %v1401 = vrot.slane %v1400, 2
    %v1402 = vadd.f32 %v1400, %v1401
    %v1403 = vrot.slane %v1402, 1
    %v1404 = vadd.f32 %v1402, %v1403
    %v1405 = vsel %vm1390, %v1264, 0.0
    %v1406 = vrot.slane %v1405, 4
    %v1407 = vadd.f32 %v1405, %v1406
    %v1408 = vrot.slane %v1407, 2
    %v1409 = vadd.f32 %v1407, %v1408
    %v1410 = vrot.slane %v1409, 1
    %v1411 = vadd.f32 %v1409, %v1410
    %v1412 = vsel %vm1390, %v1265, 0.0
    %v1413 = vrot.slane %v1412, 4
    %v1414 = vadd.f32 %v1412, %v1413
    %v1415 = vrot.slane %v1414, 2
    %v1416 = vadd.f32 %v1414, %v1415
    %v1417 = vrot.slane %v1416, 1
    %v1418 = vadd.f32 %v1416, %v1417
    %v1419 = vsel %vm1390, %v1266, 0.0
    %v1420 = vrot.slane %v1419, 4
    %v1421 = vadd.f32 %v1419, %v1420
    %v1422 = vrot.slane %v1421, 2
    %v1423 = vadd.f32 %v1421, %v1422
    %v1424 = vrot.slane %v1423, 1
    %v1425 = vadd.f32 %v1423, %v1424
    %v1426 = vsel %vm1390, %v1267, 0.0
    %v1427 = vrot.slane %v1426, 4
    %v1428 = vadd.f32 %v1426, %v1427
    %v1429 = vrot.slane %v1428, 2
    %v1430 = vadd.f32 %v1428, %v1429
    %v1431 = vrot.slane %v1430, 1
    %v1432 = vadd.f32 %v1430, %v1431
    %v1433 = vsel %vm1390, %v1268, 0.0
    %v1434 = vrot.slane %v1433, 4
    %v1435 = vadd.f32 %v1433, %v1434
    %v1436 = vrot.slane %v1435, 2
    %v1437 = vadd.f32 %v1435, %v1436
    %v1438 = vrot.slane %v1437, 1
    %v1439 = vadd.f32 %v1437, %v1438
    %v1440 = vsel %vm1390, %v1269, 0.0
    %v1441 = vrot.slane %v1440, 4
    %v1442 = vadd.f32 %v1440, %v1441
    %v1443 = vrot.slane %v1442, 2
    %v1444 = vadd.f32 %v1442, %v1443
    %v1445 = vrot.slane %v1444, 1
    %v1446 = vadd.f32 %v1444, %v1445
    %v1447 = vsel %vm1390, %v1270, 0.0
    %v1448 = vrot.slane %v1447, 4
    %v1449 = vadd.f32 %v1447, %v1448
    %v1450 = vrot.slane %v1449, 2
    %v1451 = vadd.f32 %v1449, %v1450
    %v1452 = vrot.slane %v1451, 1
    %v1453 = vadd.f32 %v1451, %v1452
    %v1454 = vsel %vm1390, %v1271, 0.0
    %v1455 = vrot.slane %v1454, 4
    %v1456 = vadd.f32 %v1454, %v1455
    %v1457 = vrot.slane %v1456, 2
    %v1458 = vadd.f32 %v1456, %v1457
    %v1459 = vrot.slane %v1458, 1
    %v1460 = vadd.f32 %v1458, %v1459
    %v1461 = vsel %vm1390, %v1272, 0.0
    %v1462 = vrot.slane %v1461, 4
    %v1463 = vadd.f32 %v1461, %v1462
    %v1464 = vrot.slane %v1463, 2
    %v1465 = vadd.f32 %v1463, %v1464
    %v1466 = vrot.slane %v1465, 1
    %v1467 = vadd.f32 %v1465, %v1466
    %v1468 = vsel %vm1390, %v1273, 0.0
    %v1469 = vrot.slane %v1468, 4
    %v1470 = vadd.f32 %v1468, %v1469
    %v1471 = vrot.slane %v1470, 2
    %v1472 = vadd.f32 %v1470, %v1471
    %v1473 = vrot.slane %v1472, 1
    %v1474 = vadd.f32 %v1472, %v1473
    %v1475 = vsel %vm1390, %v1274, 0.0
    %v1476 = vrot.slane %v1475, 4
    %v1477 = vadd.f32 %v1475, %v1476
    %v1478 = vrot.slane %v1477, 2
    %v1479 = vadd.f32 %v1477, %v1478
    %v1480 = vrot.slane %v1479, 1
    %v1481 = vadd.f32 %v1479, %v1480
    %v1482 = vsel %vm1390, %v1275, 0.0
    %v1483 = vrot.slane %v1482, 4
    %v1484 = vadd.f32 %v1482, %v1483
    %v1485 = vrot.slane %v1484, 2
    %v1486 = vadd.f32 %v1484, %v1485
    %v1487 = vrot.slane %v1486, 1
    %v1488 = vadd.f32 %v1486, %v1487
    %v1489 = vsel %vm1390, %v1276, 0.0
    %v1490 = vrot.slane %v1489, 4
    %v1491 = vadd.f32 %v1489, %v1490
    %v1492 = vrot.slane %v1491, 2
    %v1493 = vadd.f32 %v1491, %v1492
    %v1494 = vrot.slane %v1493, 1
    %v1495 = vadd.f32 %v1493, %v1494
    %v1496 = vsel %vm1390, %v1277, 0.0
    %v1497 = vrot.slane %v1496, 4
    %v1498 = vadd.f32 %v1496, %v1497
    %v1499 = vrot.slane %v1498, 2
    %v1500 = vadd.f32 %v1498, %v1499
    %v1501 = vrot.slane %v1500, 1
    %v1502 = vadd.f32 %v1500, %v1501
    %v1503 = vsel %vm1390, %v1278, 0.0
    %v1504 = vrot.slane %v1503, 4
    %v1505 = vadd.f32 %v1503, %v1504
    %v1506 = vrot.slane %v1505, 2
    %v1507 = vadd.f32 %v1505, %v1506
    %v1508 = vrot.slane %v1507, 1
    %v1509 = vadd.f32 %v1507, %v1508
    %v1510 = vsel %vm1390, %v1279, 0.0
    %v1511 = vrot.slane %v1510, 4
    %v1512 = vadd.f32 %v1510, %v1511
    %v1513 = vrot.slane %v1512, 2
    %v1514 = vadd.f32 %v1512, %v1513
    %v1515 = vrot.slane %v1514, 1
    %v1516 = vadd.f32 %v1514, %v1515
    %v1517 = vsel %vm1390, %v1280, 0.0
    %v1518 = vrot.slane %v1517, 4
    %v1519 = vadd.f32 %v1517, %v1518
    %v1520 = vrot.slane %v1519, 2
    %v1521 = vadd.f32 %v1519, %v1520
    %v1522 = vrot.slane %v1521, 1
    %v1523 = vadd.f32 %v1521, %v1522
    %v1524 = vsel %vm1390, %v1281, 0.0
    %v1525 = vrot.slane %v1524, 4
    %v1526 = vadd.f32 %v1524, %v1525
    %v1527 = vrot.slane %v1526, 2
    %v1528 = vadd.f32 %v1526, %v1527
    %v1529 = vrot.slane %v1528, 1
    %v1530 = vadd.f32 %v1528, %v1529
    %v1531 = vsel %vm1390, %v1282, 0.0
    %v1532 = vrot.slane %v1531, 4
    %v1533 = vadd.f32 %v1531, %v1532
    %v1534 = vrot.slane %v1533, 2
    %v1535 = vadd.f32 %v1533, %v1534
    %v1536 = vrot.slane %v1535, 1
    %v1537 = vadd.f32 %v1535, %v1536
    %v1538 = vsel %vm1390, %v1283, 0.0
    %v1539 = vrot.slane %v1538, 4
    %v1540 = vadd.f32 %v1538, %v1539
    %v1541 = vrot.slane %v1540, 2
    %v1542 = vadd.f32 %v1540, %v1541
    %v1543 = vrot.slane %v1542, 1
    %v1544 = vadd.f32 %v1542, %v1543
    %v1545 = vsel %vm1390, %v1284, 0.0
    %v1546 = vrot.slane %v1545, 4
    %v1547 = vadd.f32 %v1545, %v1546
    %v1548 = vrot.slane %v1547, 2
    %v1549 = vadd.f32 %v1547, %v1548
    %v1550 = vrot.slane %v1549, 1
    %v1551 = vadd.f32 %v1549, %v1550
    %v1552 = vsel %vm1390, %v1285, 0.0
    %v1553 = vrot.slane %v1552, 4
    %v1554 = vadd.f32 %v1552, %v1553
    %v1555 = vrot.slane %v1554, 2
    %v1556 = vadd.f32 %v1554, %v1555
    %v1557 = vrot.slane %v1556, 1
    %v1558 = vadd.f32 %v1556, %v1557
    %v1559 = vsel %vm1390, %v1286, 0.0
    %v1560 = vrot.slane %v1559, 4
    %v1561 = vadd.f32 %v1559, %v1560
    %v1562 = vrot.slane %v1561, 2
    %v1563 = vadd.f32 %v1561, %v1562
    %v1564 = vrot.slane %v1563, 1
    %v1565 = vadd.f32 %v1563, %v1564
    %v1566 = vsel %vm1390, %v1287, 0.0
    %v1567 = vrot.slane %v1566, 4
    %v1568 = vadd.f32 %v1566, %v1567
    %v1569 = vrot.slane %v1568, 2
    %v1570 = vadd.f32 %v1568, %v1569
    %v1571 = vrot.slane %v1570, 1
    %v1572 = vadd.f32 %v1570, %v1571
    %v1573 = vsel %vm1390, %v1288, 0.0
    %v1574 = vrot.slane %v1573, 4
    %v1575 = vadd.f32 %v1573, %v1574
    %v1576 = vrot.slane %v1575, 2
    %v1577 = vadd.f32 %v1575, %v1576
    %v1578 = vrot.slane %v1577, 1
    %v1579 = vadd.f32 %v1577, %v1578
    %v1580 = vsel %vm1390, %v1289, 0.0
    %v1581 = vrot.slane %v1580, 4
    %v1582 = vadd.f32 %v1580, %v1581
    %v1583 = vrot.slane %v1582, 2
    %v1584 = vadd.f32 %v1582, %v1583
    %v1585 = vrot.slane %v1584, 1
    %v1586 = vadd.f32 %v1584, %v1585
    %v1587 = vsel %vm1390, %v1290, 0.0
    %v1588 = vrot.slane %v1587, 4
    %v1589 = vadd.f32 %v1587, %v1588
    %v1590 = vrot.slane %v1589, 2
    %v1591 = vadd.f32 %v1589, %v1590
    %v1592 = vrot.slane %v1591, 1
    %v1593 = vadd.f32 %v1591, %v1592
    %v1594 = vsel %vm1390, %v1291, 0.0
    %v1595 = vrot.slane %v1594, 4
    %v1596 = vadd.f32 %v1594, %v1595
    %v1597 = vrot.slane %v1596, 2
    %v1598 = vadd.f32 %v1596, %v1597
    %v1599 = vrot.slane %v1598, 1
    %v1600 = vadd.f32 %v1598, %v1599
    %v1601 = vsel %vm1390, %v1292, 0.0
    %v1602 = vrot.slane %v1601, 4
    %v1603 = vadd.f32 %v1601, %v1602
    %v1604 = vrot.slane %v1603, 2
    %v1605 = vadd.f32 %v1603, %v1604
    %v1606 = vrot.slane %v1605, 1
    %v1607 = vadd.f32 %v1605, %v1606
    %v1608 = vsel %vm1390, %v1293, 0.0
    %v1609 = vrot.slane %v1608, 4
    %v1610 = vadd.f32 %v1608, %v1609
    %v1611 = vrot.slane %v1610, 2
    %v1612 = vadd.f32 %v1610, %v1611
    %v1613 = vrot.slane %v1612, 1
    %v1614 = vadd.f32 %v1612, %v1613
    %v1615 = vsel %vm1390, %v1294, 0.0
    %v1616 = vrot.slane %v1615, 4
    %v1617 = vadd.f32 %v1615, %v1616
    %v1618 = vrot.slane %v1617, 2
    %v1619 = vadd.f32 %v1617, %v1618
    %v1620 = vrot.slane %v1619, 1
    %v1621 = vadd.f32 %v1619, %v1620
    %v1622 = vsel %vm1390, %v1295, 0.0
    %v1623 = vrot.slane %v1622, 4
    %v1624 = vadd.f32 %v1622, %v1623
    %v1625 = vrot.slane %v1624, 2
    %v1626 = vadd.f32 %v1624, %v1625
    %v1627 = vrot.slane %v1626, 1
    %v1628 = vadd.f32 %v1626, %v1627
    %v1629 = vsel %vm1390, %v1296, 0.0
    %v1630 = vrot.slane %v1629, 4
    %v1631 = vadd.f32 %v1629, %v1630
    %v1632 = vrot.slane %v1631, 2
    %v1633 = vadd.f32 %v1631, %v1632
    %v1634 = vrot.slane %v1633, 1
    %v1635 = vadd.f32 %v1633, %v1634
    %v1636 = vsel %vm1390, %v1297, 0.0
    %v1637 = vrot.slane %v1636, 4
    %v1638 = vadd.f32 %v1636, %v1637
    %v1639 = vrot.slane %v1638, 2
    %v1640 = vadd.f32 %v1638, %v1639
    %v1641 = vrot.slane %v1640, 1
    %v1642 = vadd.f32 %v1640, %v1641
    %v1643 = vsel %vm1390, %v1298, 0.0
    %v1644 = vrot.slane %v1643, 4
    %v1645 = vadd.f32 %v1643, %v1644
    %v1646 = vrot.slane %v1645, 2
    %v1647 = vadd.f32 %v1645, %v1646
    %v1648 = vrot.slane %v1647, 1
    %v1649 = vadd.f32 %v1647, %v1648
    %v1650 = vsel %vm1390, %v1299, 0.0
    %v1651 = vrot.slane %v1650, 4
    %v1652 = vadd.f32 %v1650, %v1651
    %v1653 = vrot.slane %v1652, 2
    %v1654 = vadd.f32 %v1652, %v1653
    %v1655 = vrot.slane %v1654, 1
    %v1656 = vadd.f32 %v1654, %v1655
    %v1657 = vsel %vm1390, %v1300, 0.0
    %v1658 = vrot.slane %v1657, 4
    %v1659 = vadd.f32 %v1657, %v1658
    %v1660 = vrot.slane %v1659, 2
    %v1661 = vadd.f32 %v1659, %v1660
    %v1662 = vrot.slane %v1661, 1
    %v1663 = vadd.f32 %v1661, %v1662
    %v1664 = vsel %vm1390, %v1301, 0.0
    %v1665 = vrot.slane %v1664, 4
    %v1666 = vadd.f32 %v1664, %v1665
    %v1667 = vrot.slane %v1666, 2
    %v1668 = vadd.f32 %v1666, %v1667
    %v1669 = vrot.slane %v1668, 1
    %v1670 = vadd.f32 %v1668, %v1669
    %v1671 = vsel %vm1390, %v1302, 0.0
    %v1672 = vrot.slane %v1671, 4
    %v1673 = vadd.f32 %v1671, %v1672
    %v1674 = vrot.slane %v1673, 2
    %v1675 = vadd.f32 %v1673, %v1674
    %v1676 = vrot.slane %v1675, 1
    %v1677 = vadd.f32 %v1675, %v1676
    %v1678 = vsel %vm1390, %v1303, 0.0
    %v1679 = vrot.slane %v1678, 4
    %v1680 = vadd.f32 %v1678, %v1679
    %v1681 = vrot.slane %v1680, 2
    %v1682 = vadd.f32 %v1680, %v1681
    %v1683 = vrot.slane %v1682, 1
    %v1684 = vadd.f32 %v1682, %v1683
    %v1685 = vsel %vm1390, %v1304, 0.0
    %v1686 = vrot.slane %v1685, 4
    %v1687 = vadd.f32 %v1685, %v1686
    %v1688 = vrot.slane %v1687, 2
    %v1689 = vadd.f32 %v1687, %v1688
    %v1690 = vrot.slane %v1689, 1
    %v1691 = vadd.f32 %v1689, %v1690
    %v1692 = vsel %vm1390, %v1305, 0.0
    %v1693 = vrot.slane %v1692, 4
    %v1694 = vadd.f32 %v1692, %v1693
    %v1695 = vrot.slane %v1694, 2
    %v1696 = vadd.f32 %v1694, %v1695
    %v1697 = vrot.slane %v1696, 1
    %v1698 = vadd.f32 %v1696, %v1697
    %v1699 = vsel %vm1390, %v1306, 0.0
    %v1700 = vrot.slane %v1699, 4
    %v1701 = vadd.f32 %v1699, %v1700
    %v1702 = vrot.slane %v1701, 2
    %v1703 = vadd.f32 %v1701, %v1702
    %v1704 = vrot.slane %v1703, 1
    %v1705 = vadd.f32 %v1703, %v1704
    %v1706 = vsel %vm1390, %v1307, 0.0
    %v1707 = vrot.slane %v1706, 4
    %v1708 = vadd.f32 %v1706, %v1707
    %v1709 = vrot.slane %v1708, 2
    %v1710 = vadd.f32 %v1708, %v1709
    %v1711 = vrot.slane %v1710, 1
    %v1712 = vadd.f32 %v1710, %v1711
    %v1713 = vsel %vm1390, %v1308, 0.0
    %v1714 = vrot.slane %v1713, 4
    %v1715 = vadd.f32 %v1713, %v1714
    %v1716 = vrot.slane %v1715, 2
    %v1717 = vadd.f32 %v1715, %v1716
    %v1718 = vrot.slane %v1717, 1
    %v1719 = vadd.f32 %v1717, %v1718
    %v1720 = vsel %vm1390, %v1309, 0.0
    %v1721 = vrot.slane %v1720, 4
    %v1722 = vadd.f32 %v1720, %v1721
    %v1723 = vrot.slane %v1722, 2
    %v1724 = vadd.f32 %v1722, %v1723
    %v1725 = vrot.slane %v1724, 1
    %v1726 = vadd.f32 %v1724, %v1725
    %v1727 = vsel %vm1390, %v1310, 0.0
    %v1728 = vrot.slane %v1727, 4
    %v1729 = vadd.f32 %v1727, %v1728
    %v1730 = vrot.slane %v1729, 2
    %v1731 = vadd.f32 %v1729, %v1730
    %v1732 = vrot.slane %v1731, 1
    %v1733 = vadd.f32 %v1731, %v1732
    %v1734 = vsel %vm1390, %v1311, 0.0
    %v1735 = vrot.slane %v1734, 4
    %v1736 = vadd.f32 %v1734, %v1735
    %v1737 = vrot.slane %v1736, 2
    %v1738 = vadd.f32 %v1736, %v1737
    %v1739 = vrot.slane %v1738, 1
    %v1740 = vadd.f32 %v1738, %v1739
    %v1741 = vsel %vm1390, %v1312, 0.0
    %v1742 = vrot.slane %v1741, 4
    %v1743 = vadd.f32 %v1741, %v1742
    %v1744 = vrot.slane %v1743, 2
    %v1745 = vadd.f32 %v1743, %v1744
    %v1746 = vrot.slane %v1745, 1
    %v1747 = vadd.f32 %v1745, %v1746
    %v1748 = vsel %vm1390, %v1313, 0.0
    %v1749 = vrot.slane %v1748, 4
    %v1750 = vadd.f32 %v1748, %v1749
    %v1751 = vrot.slane %v1750, 2
    %v1752 = vadd.f32 %v1750, %v1751
    %v1753 = vrot.slane %v1752, 1
    %v1754 = vadd.f32 %v1752, %v1753
    %v1755 = vsel %vm1390, %v1314, 0.0
    %v1756 = vrot.slane %v1755, 4
    %v1757 = vadd.f32 %v1755, %v1756
    %v1758 = vrot.slane %v1757, 2
    %v1759 = vadd.f32 %v1757, %v1758
    %v1760 = vrot.slane %v1759, 1
    %v1761 = vadd.f32 %v1759, %v1760
    %v1762 = vsel %vm1390, %v1315, 0.0
    %v1763 = vrot.slane %v1762, 4
    %v1764 = vadd.f32 %v1762, %v1763
    %v1765 = vrot.slane %v1764, 2
    %v1766 = vadd.f32 %v1764, %v1765
    %v1767 = vrot.slane %v1766, 1
    %v1768 = vadd.f32 %v1766, %v1767
    %v1769 = vsel %vm1390, %v1316, 0.0
    %v1770 = vrot.slane %v1769, 4
    %v1771 = vadd.f32 %v1769, %v1770
    %v1772 = vrot.slane %v1771, 2
    %v1773 = vadd.f32 %v1771, %v1772
    %v1774 = vrot.slane %v1773, 1
    %v1775 = vadd.f32 %v1773, %v1774
    %v1776 = vsel %vm1390, %v1317, 0.0
    %v1777 = vrot.slane %v1776, 4
    %v1778 = vadd.f32 %v1776, %v1777
    %v1779 = vrot.slane %v1778, 2
    %v1780 = vadd.f32 %v1778, %v1779
    %v1781 = vrot.slane %v1780, 1
    %v1782 = vadd.f32 %v1780, %v1781
    %v1783 = vsel %vm1390, %v1318, 0.0
    %v1784 = vrot.slane %v1783, 4
    %v1785 = vadd.f32 %v1783, %v1784
    %v1786 = vrot.slane %v1785, 2
    %v1787 = vadd.f32 %v1785, %v1786
    %v1788 = vrot.slane %v1787, 1
    %v1789 = vadd.f32 %v1787, %v1788
    %v1790 = vsel %vm1390, %v1319, 0.0
    %v1791 = vrot.slane %v1790, 4
    %v1792 = vadd.f32 %v1790, %v1791
    %v1793 = vrot.slane %v1792, 2
    %v1794 = vadd.f32 %v1792, %v1793
    %v1795 = vrot.slane %v1794, 1
    %v1796 = vadd.f32 %v1794, %v1795
    %v1797 = vsel %vm1390, %v1320, 0.0
    %v1798 = vrot.slane %v1797, 4
    %v1799 = vadd.f32 %v1797, %v1798
    %v1800 = vrot.slane %v1799, 2
    %v1801 = vadd.f32 %v1799, %v1800
    %v1802 = vrot.slane %v1801, 1
    %v1803 = vadd.f32 %v1801, %v1802
    %v1804 = vsel %vm1390, %v1321, 0.0
    %v1805 = vrot.slane %v1804, 4
    %v1806 = vadd.f32 %v1804, %v1805
    %v1807 = vrot.slane %v1806, 2
    %v1808 = vadd.f32 %v1806, %v1807
    %v1809 = vrot.slane %v1808, 1
    %v1810 = vadd.f32 %v1808, %v1809
    %v1811 = vsel %vm1390, %v1322, 0.0
    %v1812 = vrot.slane %v1811, 4
    %v1813 = vadd.f32 %v1811, %v1812
    %v1814 = vrot.slane %v1813, 2
    %v1815 = vadd.f32 %v1813, %v1814
    %v1816 = vrot.slane %v1815, 1
    %v1817 = vadd.f32 %v1815, %v1816
    %v1818 = vsel %vm1390, %v1323, 0.0
    %v1819 = vrot.slane %v1818, 4
    %v1820 = vadd.f32 %v1818, %v1819
    %v1821 = vrot.slane %v1820, 2
    %v1822 = vadd.f32 %v1820, %v1821
    %v1823 = vrot.slane %v1822, 1
    %v1824 = vadd.f32 %v1822, %v1823
    %v1825 = vsel %vm1390, %v1324, 0.0
    %v1826 = vrot.slane %v1825, 4
    %v1827 = vadd.f32 %v1825, %v1826
    %v1828 = vrot.slane %v1827, 2
    %v1829 = vadd.f32 %v1827, %v1828
    %v1830 = vrot.slane %v1829, 1
    %v1831 = vadd.f32 %v1829, %v1830
    %v1832 = vsel %vm1390, %v1325, 0.0
    %v1833 = vrot.slane %v1832, 4
    %v1834 = vadd.f32 %v1832, %v1833
    %v1835 = vrot.slane %v1834, 2
    %v1836 = vadd.f32 %v1834, %v1835
    %v1837 = vrot.slane %v1836, 1
    %v1838 = vadd.f32 %v1836, %v1837
    %v1839 = vsel %vm1390, %v1326, 0.0
    %v1840 = vrot.slane %v1839, 4
    %v1841 = vadd.f32 %v1839, %v1840
    %v1842 = vrot.slane %v1841, 2
    %v1843 = vadd.f32 %v1841, %v1842
    %v1844 = vrot.slane %v1843, 1
    %v1845 = vadd.f32 %v1843, %v1844
    %v1846 = vsel %vm1390, %v1327, 0.0
    %v1847 = vrot.slane %v1846, 4
    %v1848 = vadd.f32 %v1846, %v1847
    %v1849 = vrot.slane %v1848, 2
    %v1850 = vadd.f32 %v1848, %v1849
    %v1851 = vrot.slane %v1850, 1
    %v1852 = vadd.f32 %v1850, %v1851
    %v1853 = vsel %vm1390, %v1328, 0.0
    %v1854 = vrot.slane %v1853, 4
    %v1855 = vadd.f32 %v1853, %v1854
    %v1856 = vrot.slane %v1855, 2
    %v1857 = vadd.f32 %v1855, %v1856
    %v1858 = vrot.slane %v1857, 1
    %v1859 = vadd.f32 %v1857, %v1858
    %v1860 = vsel %vm1390, %v1329, 0.0
    %v1861 = vrot.slane %v1860, 4
    %v1862 = vadd.f32 %v1860, %v1861
    %v1863 = vrot.slane %v1862, 2
    %v1864 = vadd.f32 %v1862, %v1863
    %v1865 = vrot.slane %v1864, 1
    %v1866 = vadd.f32 %v1864, %v1865
    %v1867 = vsel %vm1390, %v1330, 0.0
    %v1868 = vrot.slane %v1867, 4
    %v1869 = vadd.f32 %v1867, %v1868
    %v1870 = vrot.slane %v1869, 2
    %v1871 = vadd.f32 %v1869, %v1870
    %v1872 = vrot.slane %v1871, 1
    %v1873 = vadd.f32 %v1871, %v1872
    %v1874 = vsel %vm1390, %v1331, 0.0
    %v1875 = vrot.slane %v1874, 4
    %v1876 = vadd.f32 %v1874, %v1875
    %v1877 = vrot.slane %v1876, 2
    %v1878 = vadd.f32 %v1876, %v1877
    %v1879 = vrot.slane %v1878, 1
    %v1880 = vadd.f32 %v1878, %v1879
    %v1881 = vsel %vm1390, %v1332, 0.0
    %v1882 = vrot.slane %v1881, 4
    %v1883 = vadd.f32 %v1881, %v1882
    %v1884 = vrot.slane %v1883, 2
    %v1885 = vadd.f32 %v1883, %v1884
    %v1886 = vrot.slane %v1885, 1
    %v1887 = vadd.f32 %v1885, %v1886
    %v1888 = vsel %vm1390, %v1333, 0.0
    %v1889 = vrot.slane %v1888, 4
    %v1890 = vadd.f32 %v1888, %v1889
    %v1891 = vrot.slane %v1890, 2
    %v1892 = vadd.f32 %v1890, %v1891
    %v1893 = vrot.slane %v1892, 1
    %v1894 = vadd.f32 %v1892, %v1893
    %v1895 = vsel %vm1390, %v1334, 0.0
    %v1896 = vrot.slane %v1895, 4
    %v1897 = vadd.f32 %v1895, %v1896
    %v1898 = vrot.slane %v1897, 2
    %v1899 = vadd.f32 %v1897, %v1898
    %v1900 = vrot.slane %v1899, 1
    %v1901 = vadd.f32 %v1899, %v1900
    %v1902 = vsel %vm1390, %v1335, 0.0
    %v1903 = vrot.slane %v1902, 4
    %v1904 = vadd.f32 %v1902, %v1903
    %v1905 = vrot.slane %v1904, 2
    %v1906 = vadd.f32 %v1904, %v1905
    %v1907 = vrot.slane %v1906, 1
    %v1908 = vadd.f32 %v1906, %v1907
    %v1909 = vsel %vm1390, %v1336, 0.0
    %v1910 = vrot.slane %v1909, 4
    %v1911 = vadd.f32 %v1909, %v1910
    %v1912 = vrot.slane %v1911, 2
    %v1913 = vadd.f32 %v1911, %v1912
    %v1914 = vrot.slane %v1913, 1
    %v1915 = vadd.f32 %v1913, %v1914
    %v1916 = vsel %vm1390, %v1337, 0.0
    %v1917 = vrot.slane %v1916, 4
    %v1918 = vadd.f32 %v1916, %v1917
    %v1919 = vrot.slane %v1918, 2
    %v1920 = vadd.f32 %v1918, %v1919
    %v1921 = vrot.slane %v1920, 1
    %v1922 = vadd.f32 %v1920, %v1921
    %v1923 = vsel %vm1390, %v1338, 0.0
    %v1924 = vrot.slane %v1923, 4
    %v1925 = vadd.f32 %v1923, %v1924
    %v1926 = vrot.slane %v1925, 2
    %v1927 = vadd.f32 %v1925, %v1926
    %v1928 = vrot.slane %v1927, 1
    %v1929 = vadd.f32 %v1927, %v1928
    %v1930 = vsel %vm1390, %v1339, 0.0
    %v1931 = vrot.slane %v1930, 4
    %v1932 = vadd.f32 %v1930, %v1931
    %v1933 = vrot.slane %v1932, 2
    %v1934 = vadd.f32 %v1932, %v1933
    %v1935 = vrot.slane %v1934, 1
    %v1936 = vadd.f32 %v1934, %v1935
    %v1937 = vsel %vm1390, %v1340, 0.0
    %v1938 = vrot.slane %v1937, 4
    %v1939 = vadd.f32 %v1937, %v1938
    %v1940 = vrot.slane %v1939, 2
    %v1941 = vadd.f32 %v1939, %v1940
    %v1942 = vrot.slane %v1941, 1
    %v1943 = vadd.f32 %v1941, %v1942
    %v1944 = vsel %vm1390, %v1341, 0.0
    %v1945 = vrot.slane %v1944, 4
    %v1946 = vadd.f32 %v1944, %v1945
    %v1947 = vrot.slane %v1946, 2
    %v1948 = vadd.f32 %v1946, %v1947
    %v1949 = vrot.slane %v1948, 1
    %v1950 = vadd.f32 %v1948, %v1949
    %v1951 = vsel %vm1390, %v1342, 0.0
    %v1952 = vrot.slane %v1951, 4
    %v1953 = vadd.f32 %v1951, %v1952
    %v1954 = vrot.slane %v1953, 2
    %v1955 = vadd.f32 %v1953, %v1954
    %v1956 = vrot.slane %v1955, 1
    %v1957 = vadd.f32 %v1955, %v1956
    %v1958 = vsel %vm1390, %v1343, 0.0
    %v1959 = vrot.slane %v1958, 4
    %v1960 = vadd.f32 %v1958, %v1959
    %v1961 = vrot.slane %v1960, 2
    %v1962 = vadd.f32 %v1960, %v1961
    %v1963 = vrot.slane %v1962, 1
    %v1964 = vadd.f32 %v1962, %v1963
    %v1965 = vsel %vm1390, %v1344, 0.0
    %v1966 = vrot.slane %v1965, 4
    %v1967 = vadd.f32 %v1965, %v1966
    %v1968 = vrot.slane %v1967, 2
    %v1969 = vadd.f32 %v1967, %v1968
    %v1970 = vrot.slane %v1969, 1
    %v1971 = vadd.f32 %v1969, %v1970
    %v1972 = vsel %vm1390, %v1345, 0.0
    %v1973 = vrot.slane %v1972, 4
    %v1974 = vadd.f32 %v1972, %v1973
    %v1975 = vrot.slane %v1974, 2
    %v1976 = vadd.f32 %v1974, %v1975
    %v1977 = vrot.slane %v1976, 1
    %v1978 = vadd.f32 %v1976, %v1977
    %v1979 = vsel %vm1390, %v1346, 0.0
    %v1980 = vrot.slane %v1979, 4
    %v1981 = vadd.f32 %v1979, %v1980
    %v1982 = vrot.slane %v1981, 2
    %v1983 = vadd.f32 %v1981, %v1982
    %v1984 = vrot.slane %v1983, 1
    %v1985 = vadd.f32 %v1983, %v1984
    %v1986 = vsel %vm1390, %v1347, 0.0
    %v1987 = vrot.slane %v1986, 4
    %v1988 = vadd.f32 %v1986, %v1987
    %v1989 = vrot.slane %v1988, 2
    %v1990 = vadd.f32 %v1988, %v1989
    %v1991 = vrot.slane %v1990, 1
    %v1992 = vadd.f32 %v1990, %v1991
    %v1993 = vsel %vm1390, %v1348, 0.0
    %v1994 = vrot.slane %v1993, 4
    %v1995 = vadd.f32 %v1993, %v1994
    %v1996 = vrot.slane %v1995, 2
    %v1997 = vadd.f32 %v1995, %v1996
    %v1998 = vrot.slane %v1997, 1
    %v1999 = vadd.f32 %v1997, %v1998
    %v2000 = vsel %vm1390, %v1349, 0.0
    %v2001 = vrot.slane %v2000, 4
    %v2002 = vadd.f32 %v2000, %v2001
    %v2003 = vrot.slane %v2002, 2
    %v2004 = vadd.f32 %v2002, %v2003
    %v2005 = vrot.slane %v2004, 1
    %v2006 = vadd.f32 %v2004, %v2005
    %v2007 = vsel %vm1390, %v1350, 0.0
    %v2008 = vrot.slane %v2007, 4
    %v2009 = vadd.f32 %v2007, %v2008
    %v2010 = vrot.slane %v2009, 2
    %v2011 = vadd.f32 %v2009, %v2010
    %v2012 = vrot.slane %v2011, 1
    %v2013 = vadd.f32 %v2011, %v2012
    %v2014 = vsel %vm1390, %v1351, 0.0
    %v2015 = vrot.slane %v2014, 4
    %v2016 = vadd.f32 %v2014, %v2015
    %v2017 = vrot.slane %v2016, 2
    %v2018 = vadd.f32 %v2016, %v2017
    %v2019 = vrot.slane %v2018, 1
    %v2020 = vadd.f32 %v2018, %v2019
    %v2021 = vsel %vm1390, %v1352, 0.0
    %v2022 = vrot.slane %v2021, 4
    %v2023 = vadd.f32 %v2021, %v2022
    %v2024 = vrot.slane %v2023, 2
    %v2025 = vadd.f32 %v2023, %v2024
    %v2026 = vrot.slane %v2025, 1
    %v2027 = vadd.f32 %v2025, %v2026
    %v2028 = vsel %vm1390, %v1353, 0.0
    %v2029 = vrot.slane %v2028, 4
    %v2030 = vadd.f32 %v2028, %v2029
    %v2031 = vrot.slane %v2030, 2
    %v2032 = vadd.f32 %v2030, %v2031
    %v2033 = vrot.slane %v2032, 1
    %v2034 = vadd.f32 %v2032, %v2033
    %v2035 = vsel %vm1390, %v1354, 0.0
    %v2036 = vrot.slane %v2035, 4
    %v2037 = vadd.f32 %v2035, %v2036
    %v2038 = vrot.slane %v2037, 2
    %v2039 = vadd.f32 %v2037, %v2038
    %v2040 = vrot.slane %v2039, 1
    %v2041 = vadd.f32 %v2039, %v2040
    %v2042 = vsel %vm1390, %v1355, 0.0
    %v2043 = vrot.slane %v2042, 4
    %v2044 = vadd.f32 %v2042, %v2043
    %v2045 = vrot.slane %v2044, 2
    %v2046 = vadd.f32 %v2044, %v2045
    %v2047 = vrot.slane %v2046, 1
    %v2048 = vadd.f32 %v2046, %v2047
    %v2049 = vsel %vm1390, %v1356, 0.0
    %v2050 = vrot.slane %v2049, 4
    %v2051 = vadd.f32 %v2049, %v2050
    %v2052 = vrot.slane %v2051, 2
    %v2053 = vadd.f32 %v2051, %v2052
    %v2054 = vrot.slane %v2053, 1
    %v2055 = vadd.f32 %v2053, %v2054
    %v2056 = vsel %vm1390, %v1357, 0.0
    %v2057 = vrot.slane %v2056, 4
    %v2058 = vadd.f32 %v2056, %v2057
    %v2059 = vrot.slane %v2058, 2
    %v2060 = vadd.f32 %v2058, %v2059
    %v2061 = vrot.slane %v2060, 1
    %v2062 = vadd.f32 %v2060, %v2061
    %v2063 = vsel %vm1390, %v1358, 0.0
    %v2064 = vrot.slane %v2063, 4
    %v2065 = vadd.f32 %v2063, %v2064
    %v2066 = vrot.slane %v2065, 2
    %v2067 = vadd.f32 %v2065, %v2066
    %v2068 = vrot.slane %v2067, 1
    %v2069 = vadd.f32 %v2067, %v2068
    %v2070 = vsel %vm1390, %v1359, 0.0
    %v2071 = vrot.slane %v2070, 4
    %v2072 = vadd.f32 %v2070, %v2071
    %v2073 = vrot.slane %v2072, 2
    %v2074 = vadd.f32 %v2072, %v2073
    %v2075 = vrot.slane %v2074, 1
    %v2076 = vadd.f32 %v2074, %v2075
    %v2077 = vsel %vm1390, %v1360, 0.0
    %v2078 = vrot.slane %v2077, 4
    %v2079 = vadd.f32 %v2077, %v2078
    %v2080 = vrot.slane %v2079, 2
    %v2081 = vadd.f32 %v2079, %v2080
    %v2082 = vrot.slane %v2081, 1
    %v2083 = vadd.f32 %v2081, %v2082
    %v2084 = vsel %vm1390, %v1361, 0.0
    %v2085 = vrot.slane %v2084, 4
    %v2086 = vadd.f32 %v2084, %v2085
    %v2087 = vrot.slane %v2086, 2
    %v2088 = vadd.f32 %v2086, %v2087
    %v2089 = vrot.slane %v2088, 1
    %v2090 = vadd.f32 %v2088, %v2089
    %v2091 = vsel %vm1390, %v1362, 0.0
    %v2092 = vrot.slane %v2091, 4
    %v2093 = vadd.f32 %v2091, %v2092
    %v2094 = vrot.slane %v2093, 2
    %v2095 = vadd.f32 %v2093, %v2094
    %v2096 = vrot.slane %v2095, 1
    %v2097 = vadd.f32 %v2095, %v2096
    %v2098 = vsel %vm1390, %v1363, 0.0
    %v2099 = vrot.slane %v2098, 4
    %v2100 = vadd.f32 %v2098, %v2099
    %v2101 = vrot.slane %v2100, 2
    %v2102 = vadd.f32 %v2100, %v2101
    %v2103 = vrot.slane %v2102, 1
    %v2104 = vadd.f32 %v2102, %v2103
    %v2105 = vsel %vm1390, %v1364, 0.0
    %v2106 = vrot.slane %v2105, 4
    %v2107 = vadd.f32 %v2105, %v2106
    %v2108 = vrot.slane %v2107, 2
    %v2109 = vadd.f32 %v2107, %v2108
    %v2110 = vrot.slane %v2109, 1
    %v2111 = vadd.f32 %v2109, %v2110
    %v2112 = vsel %vm1390, %v1365, 0.0
    %v2113 = vrot.slane %v2112, 4
    %v2114 = vadd.f32 %v2112, %v2113
    %v2115 = vrot.slane %v2114, 2
    %v2116 = vadd.f32 %v2114, %v2115
    %v2117 = vrot.slane %v2116, 1
    %v2118 = vadd.f32 %v2116, %v2117
    %v2119 = vsel %vm1390, %v1366, 0.0
    %v2120 = vrot.slane %v2119, 4
    %v2121 = vadd.f32 %v2119, %v2120
    %v2122 = vrot.slane %v2121, 2
    %v2123 = vadd.f32 %v2121, %v2122
    %v2124 = vrot.slane %v2123, 1
    %v2125 = vadd.f32 %v2123, %v2124
    %v2126 = vsel %vm1390, %v1367, 0.0
    %v2127 = vrot.slane %v2126, 4
    %v2128 = vadd.f32 %v2126, %v2127
    %v2129 = vrot.slane %v2128, 2
    %v2130 = vadd.f32 %v2128, %v2129
    %v2131 = vrot.slane %v2130, 1
    %v2132 = vadd.f32 %v2130, %v2131
    %v2133 = vsel %vm1390, %v1368, 0.0
    %v2134 = vrot.slane %v2133, 4
    %v2135 = vadd.f32 %v2133, %v2134
    %v2136 = vrot.slane %v2135, 2
    %v2137 = vadd.f32 %v2135, %v2136
    %v2138 = vrot.slane %v2137, 1
    %v2139 = vadd.f32 %v2137, %v2138
    %v2140 = vsel %vm1390, %v1369, 0.0
    %v2141 = vrot.slane %v2140, 4
    %v2142 = vadd.f32 %v2140, %v2141
    %v2143 = vrot.slane %v2142, 2
    %v2144 = vadd.f32 %v2142, %v2143
    %v2145 = vrot.slane %v2144, 1
    %v2146 = vadd.f32 %v2144, %v2145
    %v2147 = vsel %vm1390, %v1370, 0.0
    %v2148 = vrot.slane %v2147, 4
    %v2149 = vadd.f32 %v2147, %v2148
    %v2150 = vrot.slane %v2149, 2
    %v2151 = vadd.f32 %v2149, %v2150
    %v2152 = vrot.slane %v2151, 1
    %v2153 = vadd.f32 %v2151, %v2152
    %v2154 = vsel %vm1390, %v1371, 0.0
    %v2155 = vrot.slane %v2154, 4
    %v2156 = vadd.f32 %v2154, %v2155
    %v2157 = vrot.slane %v2156, 2
    %v2158 = vadd.f32 %v2156, %v2157
    %v2159 = vrot.slane %v2158, 1
    %v2160 = vadd.f32 %v2158, %v2159
    %v2161 = vsel %vm1390, %v1372, 0.0
    %v2162 = vrot.slane %v2161, 4
    %v2163 = vadd.f32 %v2161, %v2162
    %v2164 = vrot.slane %v2163, 2
    %v2165 = vadd.f32 %v2163, %v2164
    %v2166 = vrot.slane %v2165, 1
    %v2167 = vadd.f32 %v2165, %v2166
    %v2168 = vsel %vm1390, %v1373, 0.0
    %v2169 = vrot.slane %v2168, 4
    %v2170 = vadd.f32 %v2168, %v2169
    %v2171 = vrot.slane %v2170, 2
    %v2172 = vadd.f32 %v2170, %v2171
    %v2173 = vrot.slane %v2172, 1
    %v2174 = vadd.f32 %v2172, %v2173
    %v2175 = vsel %vm1390, %v1374, 0.0
    %v2176 = vrot.slane %v2175, 4
    %v2177 = vadd.f32 %v2175, %v2176
    %v2178 = vrot.slane %v2177, 2
    %v2179 = vadd.f32 %v2177, %v2178
    %v2180 = vrot.slane %v2179, 1
    %v2181 = vadd.f32 %v2179, %v2180
    %v2182 = vsel %vm1390, %v1375, 0.0
    %v2183 = vrot.slane %v2182, 4
    %v2184 = vadd.f32 %v2182, %v2183
    %v2185 = vrot.slane %v2184, 2
    %v2186 = vadd.f32 %v2184, %v2185
    %v2187 = vrot.slane %v2186, 1
    %v2188 = vadd.f32 %v2186, %v2187
    %v2189 = vsel %vm1390, %v1376, 0.0
    %v2190 = vrot.slane %v2189, 4
    %v2191 = vadd.f32 %v2189, %v2190
    %v2192 = vrot.slane %v2191, 2
    %v2193 = vadd.f32 %v2191, %v2192
    %v2194 = vrot.slane %v2193, 1
    %v2195 = vadd.f32 %v2193, %v2194
    %v2196 = vsel %vm1390, %v1377, 0.0
    %v2197 = vrot.slane %v2196, 4
    %v2198 = vadd.f32 %v2196, %v2197
    %v2199 = vrot.slane %v2198, 2
    %v2200 = vadd.f32 %v2198, %v2199
    %v2201 = vrot.slane %v2200, 1
    %v2202 = vadd.f32 %v2200, %v2201
    %v2203 = vsel %vm1390, %v1378, 0.0
    %v2204 = vrot.slane %v2203, 4
    %v2205 = vadd.f32 %v2203, %v2204
    %v2206 = vrot.slane %v2205, 2
    %v2207 = vadd.f32 %v2205, %v2206
    %v2208 = vrot.slane %v2207, 1
    %v2209 = vadd.f32 %v2207, %v2208
    %v2210 = vsel %vm1390, %v1379, 0.0
    %v2211 = vrot.slane %v2210, 4
    %v2212 = vadd.f32 %v2210, %v2211
    %v2213 = vrot.slane %v2212, 2
    %v2214 = vadd.f32 %v2212, %v2213
    %v2215 = vrot.slane %v2214, 1
    %v2216 = vadd.f32 %v2214, %v2215
    %v2217 = vsel %vm1390, %v1380, 0.0
    %v2218 = vrot.slane %v2217, 4
    %v2219 = vadd.f32 %v2217, %v2218
    %v2220 = vrot.slane %v2219, 2
    %v2221 = vadd.f32 %v2219, %v2220
    %v2222 = vrot.slane %v2221, 1
    %v2223 = vadd.f32 %v2221, %v2222
    %v2224 = vsel %vm1390, %v1381, 0.0
    %v2225 = vrot.slane %v2224, 4
    %v2226 = vadd.f32 %v2224, %v2225
    %v2227 = vrot.slane %v2226, 2
    %v2228 = vadd.f32 %v2226, %v2227
    %v2229 = vrot.slane %v2228, 1
    %v2230 = vadd.f32 %v2228, %v2229
    %v2231 = vsel %vm1390, %v1382, 0.0
    %v2232 = vrot.slane %v2231, 4
    %v2233 = vadd.f32 %v2231, %v2232
    %v2234 = vrot.slane %v2233, 2
    %v2235 = vadd.f32 %v2233, %v2234
    %v2236 = vrot.slane %v2235, 1
    %v2237 = vadd.f32 %v2235, %v2236
    %v2238 = vsel %vm1390, %v1383, 0.0
    %v2239 = vrot.slane %v2238, 4
    %v2240 = vadd.f32 %v2238, %v2239
    %v2241 = vrot.slane %v2240, 2
    %v2242 = vadd.f32 %v2240, %v2241
    %v2243 = vrot.slane %v2242, 1
    %v2244 = vadd.f32 %v2242, %v2243
    %v2245 = vsel %vm1390, %v1384, 0.0
    %v2246 = vrot.slane %v2245, 4
    %v2247 = vadd.f32 %v2245, %v2246
    %v2248 = vrot.slane %v2247, 2
    %v2249 = vadd.f32 %v2247, %v2248
    %v2250 = vrot.slane %v2249, 1
    %v2251 = vadd.f32 %v2249, %v2250
    %v2252 = vsel %vm1390, %v1385, 0.0
    %v2253 = vrot.slane %v2252, 4
    %v2254 = vadd.f32 %v2252, %v2253
    %v2255 = vrot.slane %v2254, 2
    %v2256 = vadd.f32 %v2254, %v2255
    %v2257 = vrot.slane %v2256, 1
    %v2258 = vadd.f32 %v2256, %v2257
    %v2259 = vsel %vm1390, %v1386, 0.0
    %v2260 = vrot.slane %v2259, 4
    %v2261 = vadd.f32 %v2259, %v2260
    %v2262 = vrot.slane %v2261, 2
    %v2263 = vadd.f32 %v2261, %v2262
    %v2264 = vrot.slane %v2263, 1
    %v2265 = vadd.f32 %v2263, %v2264
    %v2266 = vsel %vm1390, %v1387, 0.0
    %v2267 = vrot.slane %v2266, 4
    %v2268 = vadd.f32 %v2266, %v2267
    %v2269 = vrot.slane %v2268, 2
    %v2270 = vadd.f32 %v2268, %v2269
    %v2271 = vrot.slane %v2270, 1
    %v2272 = vadd.f32 %v2270, %v2271
    %v2273 = vsel %vm1390, %v1388, 0.0
    %v2274 = vrot.slane %v2273, 4
    %v2275 = vadd.f32 %v2273, %v2274
    %v2276 = vrot.slane %v2275, 2
    %v2277 = vadd.f32 %v2275, %v2276
    %v2278 = vrot.slane %v2277, 1
    %v2279 = vadd.f32 %v2277, %v2278
    %v2280 = vsel %vm1390, %v1389, 0.0
    %v2281 = vrot.slane %v2280, 4
    %v2282 = vadd.f32 %v2280, %v2281
    %v2283 = vrot.slane %v2282, 2
    %v2284 = vadd.f32 %v2282, %v2283
    %v2285 = vrot.slane %v2284, 1
    %v2286 = vadd.f32 %v2284, %v2285
    %v2287 = vpack.c.bf16 %v1397, %v1397
    %v2288 = vpack.c.bf16 %v1404, %v1404
    %v2289 = vpack.c.bf16 %v1411, %v1411
    %v2290 = vpack.c.bf16 %v1418, %v1418
    %v2291 = vpack.c.bf16 %v1425, %v1425
    %v2292 = vpack.c.bf16 %v1432, %v1432
    %v2293 = vpack.c.bf16 %v1439, %v1439
    %v2294 = vpack.c.bf16 %v1446, %v1446
    %v2295 = vpack.c.bf16 %v1453, %v1453
    %v2296 = vpack.c.bf16 %v1460, %v1460
    %v2297 = vpack.c.bf16 %v1467, %v1467
    %v2298 = vpack.c.bf16 %v1474, %v1474
    %v2299 = vpack.c.bf16 %v1481, %v1481
    %v2300 = vpack.c.bf16 %v1488, %v1488
    %v2301 = vpack.c.bf16 %v1495, %v1495
    %v2302 = vpack.c.bf16 %v1502, %v1502
    %v2303 = vpack.c.bf16 %v1509, %v1509
    %v2304 = vpack.c.bf16 %v1516, %v1516
    %v2305 = vpack.c.bf16 %v1523, %v1523
    %v2306 = vpack.c.bf16 %v1530, %v1530
    %v2307 = vpack.c.bf16 %v1537, %v1537
    %v2308 = vpack.c.bf16 %v1544, %v1544
    %v2309 = vpack.c.bf16 %v1551, %v1551
    %v2310 = vpack.c.bf16 %v1558, %v1558
    %v2311 = vpack.c.bf16 %v1565, %v1565
    %v2312 = vpack.c.bf16 %v1572, %v1572
    %v2313 = vpack.c.bf16 %v1579, %v1579
    %v2314 = vpack.c.bf16 %v1586, %v1586
    %v2315 = vpack.c.bf16 %v1593, %v1593
    %v2316 = vpack.c.bf16 %v1600, %v1600
    %v2317 = vpack.c.bf16 %v1607, %v1607
    %v2318 = vpack.c.bf16 %v1614, %v1614
    %v2319 = vpack.c.bf16 %v1621, %v1621
    %v2320 = vpack.c.bf16 %v1628, %v1628
    %v2321 = vpack.c.bf16 %v1635, %v1635
    %v2322 = vpack.c.bf16 %v1642, %v1642
    %v2323 = vpack.c.bf16 %v1649, %v1649
    %v2324 = vpack.c.bf16 %v1656, %v1656
    %v2325 = vpack.c.bf16 %v1663, %v1663
    %v2326 = vpack.c.bf16 %v1670, %v1670
    %v2327 = vpack.c.bf16 %v1677, %v1677
    %v2328 = vpack.c.bf16 %v1684, %v1684
    %v2329 = vpack.c.bf16 %v1691, %v1691
    %v2330 = vpack.c.bf16 %v1698, %v1698
    %v2331 = vpack.c.bf16 %v1705, %v1705
    %v2332 = vpack.c.bf16 %v1712, %v1712
    %v2333 = vpack.c.bf16 %v1719, %v1719
    %v2334 = vpack.c.bf16 %v1726, %v1726
    %v2335 = vpack.c.bf16 %v1733, %v1733
    %v2336 = vpack.c.bf16 %v1740, %v1740
    %v2337 = vpack.c.bf16 %v1747, %v1747
    %v2338 = vpack.c.bf16 %v1754, %v1754
    %v2339 = vpack.c.bf16 %v1761, %v1761
    %v2340 = vpack.c.bf16 %v1768, %v1768
    %v2341 = vpack.c.bf16 %v1775, %v1775
    %v2342 = vpack.c.bf16 %v1782, %v1782
    %v2343 = vpack.c.bf16 %v1789, %v1789
    %v2344 = vpack.c.bf16 %v1796, %v1796
    %v2345 = vpack.c.bf16 %v1803, %v1803
    %v2346 = vpack.c.bf16 %v1810, %v1810
    %v2347 = vpack.c.bf16 %v1817, %v1817
    %v2348 = vpack.c.bf16 %v1824, %v1824
    %v2349 = vpack.c.bf16 %v1831, %v1831
    %v2350 = vpack.c.bf16 %v1838, %v1838
    %v2351 = vpack.c.bf16 %v1845, %v1845
    %v2352 = vpack.c.bf16 %v1852, %v1852
    %v2353 = vpack.c.bf16 %v1859, %v1859
    %v2354 = vpack.c.bf16 %v1866, %v1866
    %v2355 = vpack.c.bf16 %v1873, %v1873
    %v2356 = vpack.c.bf16 %v1880, %v1880
    %v2357 = vpack.c.bf16 %v1887, %v1887
    %v2358 = vpack.c.bf16 %v1894, %v1894
    %v2359 = vpack.c.bf16 %v1901, %v1901
    %v2360 = vpack.c.bf16 %v1908, %v1908
    %v2361 = vpack.c.bf16 %v1915, %v1915
    %v2362 = vpack.c.bf16 %v1922, %v1922
    %v2363 = vpack.c.bf16 %v1929, %v1929
    %v2364 = vpack.c.bf16 %v1936, %v1936
    %v2365 = vpack.c.bf16 %v1943, %v1943
    %v2366 = vpack.c.bf16 %v1950, %v1950
    %v2367 = vpack.c.bf16 %v1957, %v1957
    %v2368 = vpack.c.bf16 %v1964, %v1964
    %v2369 = vpack.c.bf16 %v1971, %v1971
    %v2370 = vpack.c.bf16 %v1978, %v1978
    %v2371 = vpack.c.bf16 %v1985, %v1985
    %v2372 = vpack.c.bf16 %v1992, %v1992
    %v2373 = vpack.c.bf16 %v1999, %v1999
    %v2374 = vpack.c.bf16 %v2006, %v2006
    %v2375 = vpack.c.bf16 %v2013, %v2013
    %v2376 = vpack.c.bf16 %v2020, %v2020
    %v2377 = vpack.c.bf16 %v2027, %v2027
    %v2378 = vpack.c.bf16 %v2034, %v2034
    %v2379 = vpack.c.bf16 %v2041, %v2041
    %v2380 = vpack.c.bf16 %v2048, %v2048
    %v2381 = vpack.c.bf16 %v2055, %v2055
    %v2382 = vpack.c.bf16 %v2062, %v2062
    %v2383 = vpack.c.bf16 %v2069, %v2069
    %v2384 = vpack.c.bf16 %v2076, %v2076
    %v2385 = vpack.c.bf16 %v2083, %v2083
    %v2386 = vpack.c.bf16 %v2090, %v2090
    %v2387 = vpack.c.bf16 %v2097, %v2097
    %v2388 = vpack.c.bf16 %v2104, %v2104
    %v2389 = vpack.c.bf16 %v2111, %v2111
    %v2390 = vpack.c.bf16 %v2118, %v2118
    %v2391 = vpack.c.bf16 %v2125, %v2125
    %v2392 = vpack.c.bf16 %v2132, %v2132
    %v2393 = vpack.c.bf16 %v2139, %v2139
    %v2394 = vpack.c.bf16 %v2146, %v2146
    %v2395 = vpack.c.bf16 %v2153, %v2153
    %v2396 = vpack.c.bf16 %v2160, %v2160
    %v2397 = vpack.c.bf16 %v2167, %v2167
    %v2398 = vpack.c.bf16 %v2174, %v2174
    %v2399 = vpack.c.bf16 %v2181, %v2181
    %v2400 = vpack.c.bf16 %v2188, %v2188
    %v2401 = vpack.c.bf16 %v2195, %v2195
    %v2402 = vpack.c.bf16 %v2202, %v2202
    %v2403 = vpack.c.bf16 %v2209, %v2209
    %v2404 = vpack.c.bf16 %v2216, %v2216
    %v2405 = vpack.c.bf16 %v2223, %v2223
    %v2406 = vpack.c.bf16 %v2230, %v2230
    %v2407 = vpack.c.bf16 %v2237, %v2237
    %v2408 = vpack.c.bf16 %v2244, %v2244
    %v2409 = vpack.c.bf16 %v2251, %v2251
    %v2410 = vpack.c.bf16 %v2258, %v2258
    %v2411 = vpack.c.bf16 %v2265, %v2265
    %v2412 = vpack.c.bf16 %v2272, %v2272
    %v2413 = vpack.c.bf16 %v2279, %v2279
    %v2414 = vpack.c.bf16 %v2286, %v2286
    %v2415 = vld [vmem:[%s3] sm:$0xf]
    %v2416 = vld [vmem:[%s4] sm:$0x1]
    %v2418 = vlaneseq
    %v2419 = vshrl.u32 %v2418, 7
    %v2420 = vsub.s32 0, %v2419
    %v2421 = vrot.slane %v2416, %v2420
    %v2551 = vunpack.c.l.b16 %v2287
    %v2552 = vunpack.c.l.b16 %v2288
    %v2553 = vunpack.c.l.b16 %v2289
    %v2554 = vunpack.c.l.b16 %v2290
    %v2555 = vunpack.c.l.b16 %v2291
    %v2556 = vunpack.c.l.b16 %v2292
    %v2557 = vunpack.c.l.b16 %v2293
    %v2558 = vunpack.c.l.b16 %v2294
    %v2559 = vunpack.c.l.b16 %v2295
    %v2560 = vunpack.c.l.b16 %v2296
    %v2561 = vunpack.c.l.b16 %v2297
    %v2562 = vunpack.c.l.b16 %v2298
    %v2563 = vunpack.c.l.b16 %v2299
    %v2564 = vunpack.c.l.b16 %v2300
    %v2565 = vunpack.c.l.b16 %v2301
    %v2566 = vunpack.c.l.b16 %v2302
    %v2567 = vunpack.c.l.b16 %v2303
    %v2568 = vunpack.c.l.b16 %v2304
    %v2569 = vunpack.c.l.b16 %v2305
    %v2570 = vunpack.c.l.b16 %v2306
    %v2571 = vunpack.c.l.b16 %v2307
    %v2572 = vunpack.c.l.b16 %v2308
    %v2573 = vunpack.c.l.b16 %v2309
    %v2574 = vunpack.c.l.b16 %v2310
    %v2575 = vunpack.c.l.b16 %v2311
    %v2576 = vunpack.c.l.b16 %v2312
    %v2577 = vunpack.c.l.b16 %v2313
    %v2578 = vunpack.c.l.b16 %v2314
    %v2579 = vunpack.c.l.b16 %v2315
    %v2580 = vunpack.c.l.b16 %v2316
    %v2581 = vunpack.c.l.b16 %v2317
    %v2582 = vunpack.c.l.b16 %v2318
    %v2583 = vunpack.c.l.b16 %v2319
    %v2584 = vunpack.c.l.b16 %v2320
    %v2585 = vunpack.c.l.b16 %v2321
    %v2586 = vunpack.c.l.b16 %v2322
    %v2587 = vunpack.c.l.b16 %v2323
    %v2588 = vunpack.c.l.b16 %v2324
    %v2589 = vunpack.c.l.b16 %v2325
    %v2590 = vunpack.c.l.b16 %v2326
    %v2591 = vunpack.c.l.b16 %v2327
    %v2592 = vunpack.c.l.b16 %v2328
    %v2593 = vunpack.c.l.b16 %v2329
    %v2594 = vunpack.c.l.b16 %v2330
    %v2595 = vunpack.c.l.b16 %v2331
    %v2596 = vunpack.c.l.b16 %v2332
    %v2597 = vunpack.c.l.b16 %v2333
    %v2598 = vunpack.c.l.b16 %v2334
    %v2599 = vunpack.c.l.b16 %v2335
    %v2600 = vunpack.c.l.b16 %v2336
    %v2601 = vunpack.c.l.b16 %v2337
    %v2602 = vunpack.c.l.b16 %v2338
    %v2603 = vunpack.c.l.b16 %v2339
    %v2604 = vunpack.c.l.b16 %v2340
    %v2605 = vunpack.c.l.b16 %v2341
    %v2606 = vunpack.c.l.b16 %v2342
    %v2607 = vunpack.c.l.b16 %v2343
    %v2608 = vunpack.c.l.b16 %v2344
    %v2609 = vunpack.c.l.b16 %v2345
    %v2610 = vunpack.c.l.b16 %v2346
    %v2611 = vunpack.c.l.b16 %v2347
    %v2612 = vunpack.c.l.b16 %v2348
    %v2613 = vunpack.c.l.b16 %v2349
    %v2614 = vunpack.c.l.b16 %v2350
    %v2615 = vunpack.c.l.b16 %v2351
    %v2616 = vunpack.c.l.b16 %v2352
    %v2617 = vunpack.c.l.b16 %v2353
    %v2618 = vunpack.c.l.b16 %v2354
    %v2619 = vunpack.c.l.b16 %v2355
    %v2620 = vunpack.c.l.b16 %v2356
    %v2621 = vunpack.c.l.b16 %v2357
    %v2622 = vunpack.c.l.b16 %v2358
    %v2623 = vunpack.c.l.b16 %v2359
    %v2624 = vunpack.c.l.b16 %v2360
    %v2625 = vunpack.c.l.b16 %v2361
    %v2626 = vunpack.c.l.b16 %v2362
    %v2627 = vunpack.c.l.b16 %v2363
    %v2628 = vunpack.c.l.b16 %v2364
    %v2629 = vunpack.c.l.b16 %v2365
    %v2630 = vunpack.c.l.b16 %v2366
    %v2631 = vunpack.c.l.b16 %v2367
    %v2632 = vunpack.c.l.b16 %v2368
    %v2633 = vunpack.c.l.b16 %v2369
    %v2634 = vunpack.c.l.b16 %v2370
    %v2635 = vunpack.c.l.b16 %v2371
    %v2636 = vunpack.c.l.b16 %v2372
    %v2637 = vunpack.c.l.b16 %v2373
    %v2638 = vunpack.c.l.b16 %v2374
    %v2639 = vunpack.c.l.b16 %v2375
    %v2640 = vunpack.c.l.b16 %v2376
    %v2641 = vunpack.c.l.b16 %v2377
    %v2642 = vunpack.c.l.b16 %v2378
    %v2643 = vunpack.c.l.b16 %v2379
    %v2644 = vunpack.c.l.b16 %v2380
    %v2645 = vunpack.c.l.b16 %v2381
    %v2646 = vunpack.c.l.b16 %v2382
    %v2647 = vunpack.c.l.b16 %v2383
    %v2648 = vunpack.c.l.b16 %v2384
    %v2649 = vunpack.c.l.b16 %v2385
    %v2650 = vunpack.c.l.b16 %v2386
    %v2651 = vunpack.c.l.b16 %v2387
    %v2652 = vunpack.c.l.b16 %v2388
    %v2653 = vunpack.c.l.b16 %v2389
    %v2654 = vunpack.c.l.b16 %v2390
    %v2655 = vunpack.c.l.b16 %v2391
    %v2656 = vunpack.c.l.b16 %v2392
    %v2657 = vunpack.c.l.b16 %v2393
    %v2658 = vunpack.c.l.b16 %v2394
    %v2659 = vunpack.c.l.b16 %v2395
    %v2660 = vunpack.c.l.b16 %v2396
    %v2661 = vunpack.c.l.b16 %v2397
    %v2662 = vunpack.c.l.b16 %v2398
    %v2663 = vunpack.c.l.b16 %v2399
    %v2664 = vunpack.c.l.b16 %v2400
    %v2665 = vunpack.c.l.b16 %v2401
    %v2666 = vunpack.c.l.b16 %v2402
    %v2667 = vunpack.c.l.b16 %v2403
    %v2668 = vunpack.c.l.b16 %v2404
    %v2669 = vunpack.c.l.b16 %v2405
    %v2670 = vunpack.c.l.b16 %v2406
    %v2671 = vunpack.c.l.b16 %v2407
    %v2672 = vunpack.c.l.b16 %v2408
    %v2673 = vunpack.c.l.b16 %v2409
    %v2674 = vunpack.c.l.b16 %v2410
    %v2675 = vunpack.c.l.b16 %v2411
    %v2676 = vunpack.c.l.b16 %v2412
    %v2677 = vunpack.c.l.b16 %v2413
    %v2678 = vunpack.c.l.b16 %v2414
    %vm2679 = vcmask 1041409
    %v2680 = vsel %vm2679, %v2552, %v2551
    %vm2681 = vcmask 1042434
    %v2682 = vsel %vm2681, %v2553, %v2680
    %vm2683 = vcmask 1043459
    %v2684 = vsel %vm2683, %v2554, %v2682
    %vm2685 = vcmask 1044484
    %v2686 = vsel %vm2685, %v2555, %v2684
    %vm2687 = vcmask 1045509
    %v2688 = vsel %vm2687, %v2556, %v2686
    %vm2689 = vcmask 1046534
    %v2690 = vsel %vm2689, %v2557, %v2688
    %vm2691 = vcmask 1047559
    %v2692 = vsel %vm2691, %v2558, %v2690
    %v2693 = vsel %vm2679, %v2560, %v2559
    %v2694 = vsel %vm2681, %v2561, %v2693
    %v2695 = vsel %vm2683, %v2562, %v2694
    %v2696 = vsel %vm2685, %v2563, %v2695
    %v2697 = vsel %vm2687, %v2564, %v2696
    %v2698 = vsel %vm2689, %v2565, %v2697
    %v2699 = vsel %vm2691, %v2566, %v2698
    %v2700 = vsel %vm2679, %v2568, %v2567
    %v2701 = vsel %vm2681, %v2569, %v2700
    %v2702 = vsel %vm2683, %v2570, %v2701
    %v2703 = vsel %vm2685, %v2571, %v2702
    %v2704 = vsel %vm2687, %v2572, %v2703
    %v2705 = vsel %vm2689, %v2573, %v2704
    %v2706 = vsel %vm2691, %v2574, %v2705
    %v2707 = vsel %vm2679, %v2576, %v2575
    %v2708 = vsel %vm2681, %v2577, %v2707
    %v2709 = vsel %vm2683, %v2578, %v2708
    %v2710 = vsel %vm2685, %v2579, %v2709
    %v2711 = vsel %vm2687, %v2580, %v2710
    %v2712 = vsel %vm2689, %v2581, %v2711
    %v2713 = vsel %vm2691, %v2582, %v2712
    %v2714 = vsel %vm2679, %v2584, %v2583
    %v2715 = vsel %vm2681, %v2585, %v2714
    %v2716 = vsel %vm2683, %v2586, %v2715
    %v2717 = vsel %vm2685, %v2587, %v2716
    %v2718 = vsel %vm2687, %v2588, %v2717
    %v2719 = vsel %vm2689, %v2589, %v2718
    %v2720 = vsel %vm2691, %v2590, %v2719
    %v2721 = vsel %vm2679, %v2592, %v2591
    %v2722 = vsel %vm2681, %v2593, %v2721
    %v2723 = vsel %vm2683, %v2594, %v2722
    %v2724 = vsel %vm2685, %v2595, %v2723
    %v2725 = vsel %vm2687, %v2596, %v2724
    %v2726 = vsel %vm2689, %v2597, %v2725
    %v2727 = vsel %vm2691, %v2598, %v2726
    %v2728 = vsel %vm2679, %v2600, %v2599
    %v2729 = vsel %vm2681, %v2601, %v2728
    %v2730 = vsel %vm2683, %v2602, %v2729
    %v2731 = vsel %vm2685, %v2603, %v2730
    %v2732 = vsel %vm2687, %v2604, %v2731
    %v2733 = vsel %vm2689, %v2605, %v2732
    %v2734 = vsel %vm2691, %v2606, %v2733
    %v2735 = vsel %vm2679, %v2608, %v2607
    %v2736 = vsel %vm2681, %v2609, %v2735
    %v2737 = vsel %vm2683, %v2610, %v2736
    %v2738 = vsel %vm2685, %v2611, %v2737
    %v2739 = vsel %vm2687, %v2612, %v2738
    %v2740 = vsel %vm2689, %v2613, %v2739
    %v2741 = vsel %vm2691, %v2614, %v2740
    %v2742 = vsel %vm2679, %v2616, %v2615
    %v2743 = vsel %vm2681, %v2617, %v2742
    %v2744 = vsel %vm2683, %v2618, %v2743
    %v2745 = vsel %vm2685, %v2619, %v2744
    %v2746 = vsel %vm2687, %v2620, %v2745
    %v2747 = vsel %vm2689, %v2621, %v2746
    %v2748 = vsel %vm2691, %v2622, %v2747
    %v2749 = vsel %vm2679, %v2624, %v2623
    %v2750 = vsel %vm2681, %v2625, %v2749
    %v2751 = vsel %vm2683, %v2626, %v2750
    %v2752 = vsel %vm2685, %v2627, %v2751
    %v2753 = vsel %vm2687, %v2628, %v2752
    %v2754 = vsel %vm2689, %v2629, %v2753
    %v2755 = vsel %vm2691, %v2630, %v2754
    %v2756 = vsel %vm2679, %v2632, %v2631
    %v2757 = vsel %vm2681, %v2633, %v2756
    %v2758 = vsel %vm2683, %v2634, %v2757
    %v2759 = vsel %vm2685, %v2635, %v2758
    %v2760 = vsel %vm2687, %v2636, %v2759
    %v2761 = vsel %vm2689, %v2637, %v2760
    %v2762 = vsel %vm2691, %v2638, %v2761
    %v2763 = vsel %vm2679, %v2640, %v2639
    %v2764 = vsel %vm2681, %v2641, %v2763
    %v2765 = vsel %vm2683, %v2642, %v2764
    %v2766 = vsel %vm2685, %v2643, %v2765
    %v2767 = vsel %vm2687, %v2644, %v2766
    %v2768 = vsel %vm2689, %v2645, %v2767
    %v2769 = vsel %vm2691, %v2646, %v2768
    %v2770 = vsel %vm2679, %v2648, %v2647
    %v2771 = vsel %vm2681, %v2649, %v2770
    %v2772 = vsel %vm2683, %v2650, %v2771
    %v2773 = vsel %vm2685, %v2651, %v2772
    %v2774 = vsel %vm2687, %v2652, %v2773
    %v2775 = vsel %vm2689, %v2653, %v2774
    %v2776 = vsel %vm2691, %v2654, %v2775
    %v2777 = vsel %vm2679, %v2656, %v2655
    %v2778 = vsel %vm2681, %v2657, %v2777
    %v2779 = vsel %vm2683, %v2658, %v2778
    %v2780 = vsel %vm2685, %v2659, %v2779
    %v2781 = vsel %vm2687, %v2660, %v2780
    %v2782 = vsel %vm2689, %v2661, %v2781
    %v2783 = vsel %vm2691, %v2662, %v2782
    %v2784 = vsel %vm2679, %v2664, %v2663
    %v2785 = vsel %vm2681, %v2665, %v2784
    %v2786 = vsel %vm2683, %v2666, %v2785
    %v2787 = vsel %vm2685, %v2667, %v2786
    %v2788 = vsel %vm2687, %v2668, %v2787
    %v2789 = vsel %vm2689, %v2669, %v2788
    %v2790 = vsel %vm2691, %v2670, %v2789
    %v2791 = vsel %vm2679, %v2672, %v2671
    %v2792 = vsel %vm2681, %v2673, %v2791
    %v2793 = vsel %vm2683, %v2674, %v2792
    %v2794 = vsel %vm2685, %v2675, %v2793
    %v2795 = vsel %vm2687, %v2676, %v2794
    %v2796 = vsel %vm2689, %v2677, %v2795
    %v2797 = vsel %vm2691, %v2678, %v2796
    %v2798 = vpack.c.b16 %v2699, %v2692
    %v2799 = vpack.c.b16 %v2713, %v2706
    %v2800 = vpack.c.b16 %v2727, %v2720
    %v2801 = vpack.c.b16 %v2741, %v2734
    %v2802 = vpack.c.b16 %v2755, %v2748
    %v2803 = vpack.c.b16 %v2769, %v2762
    %v2804 = vpack.c.b16 %v2783, %v2776
    %v2805 = vpack.c.b16 %v2797, %v2790
    %vm2806 = vcmask 64512
    %v2808 = vsel %vm2806, %v2798, 0
    %v2811 = vsel %vm2806, %v2799, 0
    %v2814 = vsel %vm2806, %v2800, 0
    %v2817 = vsel %vm2806, %v2801, 0
    %v2820 = vsel %vm2806, %v2802, 0
    %v2823 = vsel %vm2806, %v2803, 0
    %v2826 = vsel %vm2806, %v2804, 0
    %v2829 = vsel %vm2806, %v2805, 0
    %vm2831 = vcmask 1043456
    %v2833 = vsel %vm2831, %v2415, 0
    %2835 = vmatprep.subr.bf16.mxu0 0
    %2836 = vmatpush1.bf16.msra.mxu0 %v2833
    %2837 = vmatprep.subr.bf16.mxu0 0
    %2838 = vmatpush1.bf16.msra.mxu0 0
    %2839 = vmatprep.subr.bf16.mxu0 0
    %2840 = vmatpush1.bf16.msra.mxu0 0
    %2841 = vmatprep.subr.bf16.mxu0 0
    %2842 = vmatpush1.bf16.msra.mxu0 0
    %2843 = vmatprep.subr.bf16.mxu0 0
    %2844 = vmatpush1.bf16.msra.mxu0 0
    %2845 = vmatprep.subr.bf16.mxu0 0
    %2846 = vmatpush1.bf16.msra.mxu0 0
    %2847 = vmatprep.subr.bf16.mxu0 0
    %2848 = vmatpush1.bf16.msra.mxu0 0
    %2849 = vmatprep.subr.bf16.mxu0 0
    %2850 = vmatpush1.bf16.msra.mxu0 0
    %2851 = vmatprep.subr.bf16.mxu0 0
    %2852 = vmatpush1.bf16.msra.mxu0 0
    %2853 = vmatprep.subr.bf16.mxu0 0
    %2854 = vmatpush1.bf16.msra.mxu0 0
    %2855 = vmatprep.subr.bf16.mxu0 0
    %2856 = vmatpush1.bf16.msra.mxu0 0
    %2857 = vmatprep.subr.bf16.mxu0 0
    %2858 = vmatpush1.bf16.msra.mxu0 0
    %2859 = vmatprep.subr.bf16.mxu0 0
    %2860 = vmatpush1.bf16.msra.mxu0 0
    %2861 = vmatprep.subr.bf16.mxu0 0
    %2862 = vmatpush1.bf16.msra.mxu0 0
    %2863 = vmatprep.subr.bf16.mxu0 0
    %2864 = vmatpush1.bf16.msra.mxu0 0
    %2865 = vmatprep.subr.bf16.mxu0 0
    %2866 = vmatpush1.bf16.msra.mxu0 0
    %2867 = vmatprep.mubr.bf16.mxu0 0
    %2868 = vmatmul.mubr.bf16.gmra.mrb[0].mxu0 %v2808
    %v2869 = vpop.f32.mrb[0].mxu0
    %v2870 = vadd.f32 %v2421, %v2869
    %v2871 = vpop.f32.mrb[0].mxu0
    %v2872 = vpop.f32.mrb[0].mxu0
    %v2873 = vadd.f32 %v2421, %v2872
    %v2874 = vpop.f32.mrb[0].mxu0
    %2875 = vmatprep.mubr.bf16.mxu0 0
    %2876 = vmatmul.mubr.bf16.gmra.mrb[0].mxu0 %v2811
    %v2877 = vpop.f32.mrb[0].mxu0
    %v2878 = vadd.f32 %v2421, %v2877
    %v2879 = vpop.f32.mrb[0].mxu0
    %v2880 = vpop.f32.mrb[0].mxu0
    %v2881 = vadd.f32 %v2421, %v2880
    %v2882 = vpop.f32.mrb[0].mxu0
    %2883 = vmatprep.mubr.bf16.mxu0 0
    %2884 = vmatmul.mubr.bf16.gmra.mrb[0].mxu0 %v2814
    %v2885 = vpop.f32.mrb[0].mxu0
    %v2886 = vadd.f32 %v2421, %v2885
    %v2887 = vpop.f32.mrb[0].mxu0
    %v2888 = vpop.f32.mrb[0].mxu0
    %v2889 = vadd.f32 %v2421, %v2888
    %v2890 = vpop.f32.mrb[0].mxu0
    %2891 = vmatprep.mubr.bf16.mxu0 0
    %2892 = vmatmul.mubr.bf16.gmra.mrb[0].mxu0 %v2817
    %v2893 = vpop.f32.mrb[0].mxu0
    %v2894 = vadd.f32 %v2421, %v2893
    %v2895 = vpop.f32.mrb[0].mxu0
    %v2896 = vpop.f32.mrb[0].mxu0
    %v2897 = vadd.f32 %v2421, %v2896
    %v2898 = vpop.f32.mrb[0].mxu0
    %2899 = vmatprep.mubr.bf16.mxu0 0
    %2900 = vmatmul.mubr.bf16.gmra.mrb[0].mxu0 %v2820
    %v2901 = vpop.f32.mrb[0].mxu0
    %v2902 = vadd.f32 %v2421, %v2901
    %v2903 = vpop.f32.mrb[0].mxu0
    %v2904 = vpop.f32.mrb[0].mxu0
    %v2905 = vadd.f32 %v2421, %v2904
    %v2906 = vpop.f32.mrb[0].mxu0
    %2907 = vmatprep.mubr.bf16.mxu0 0
    %2908 = vmatmul.mubr.bf16.gmra.mrb[0].mxu0 %v2823
    %v2909 = vpop.f32.mrb[0].mxu0
    %v2910 = vadd.f32 %v2421, %v2909
    %v2911 = vpop.f32.mrb[0].mxu0
    %v2912 = vpop.f32.mrb[0].mxu0
    %v2913 = vadd.f32 %v2421, %v2912
    %v2914 = vpop.f32.mrb[0].mxu0
    %2915 = vmatprep.mubr.bf16.mxu0 0
    %2916 = vmatmul.mubr.bf16.gmra.mrb[0].mxu0 %v2826
    %v2917 = vpop.f32.mrb[0].mxu0
    %v2918 = vadd.f32 %v2421, %v2917
    %v2919 = vpop.f32.mrb[0].mxu0
    %v2920 = vpop.f32.mrb[0].mxu0
    %v2921 = vadd.f32 %v2421, %v2920
    %v2922 = vpop.f32.mrb[0].mxu0
    %2923 = vmatprep.mubr.bf16.mxu0 0
    %2924 = vmatmul.mubr.bf16.gmra.mrb[0].mxu0 %v2829
    %v2925 = vpop.f32.mrb[0].mxu0
    %v2926 = vadd.f32 %v2421, %v2925
    %v2927 = vpop.f32.mrb[0].mxu0
    %v2928 = vpop.f32.mrb[0].mxu0
    %v2929 = vadd.f32 %v2421, %v2928
    %v2930 = vpop.f32.mrb[0].mxu0
    %2931 = vdwg.mxu0
    %2932 = vst [vmem:[#allocation2] sm:$0xff] %v2870
    %2933 = vst [vmem:[#allocation2 + $0x8] sm:$0xff] %v2873
    %2934 = vst [vmem:[#allocation2 + $0x10] sm:$0xff] %v2878
    %2935 = vst [vmem:[#allocation2 + $0x18] sm:$0xff] %v2881
    %2936 = vst [vmem:[#allocation2 + $0x20] sm:$0xff] %v2886
    %2937 = vst [vmem:[#allocation2 + $0x28] sm:$0xff] %v2889
    %2938 = vst [vmem:[#allocation2 + $0x30] sm:$0xff] %v2894
    %2939 = vst [vmem:[#allocation2 + $0x38] sm:$0xff] %v2897
    %2940 = vst [vmem:[#allocation2 + $0x40] sm:$0xff] %v2902
    %2941 = vst [vmem:[#allocation2 + $0x48] sm:$0xff] %v2905
    %2942 = vst [vmem:[#allocation2 + $0x50] sm:$0xff] %v2910
    %2943 = vst [vmem:[#allocation2 + $0x58] sm:$0xff] %v2913
    %2944 = vst [vmem:[#allocation2 + $0x60] sm:$0xff] %v2918
    %2945 = vst [vmem:[#allocation2 + $0x68] sm:$0xff] %v2921
    %2946 = vst [vmem:[#allocation2 + $0x70] sm:$0xff] %v2926
    %2947 = vst [vmem:[#allocation2 + $0x78] sm:$0xff] %v2929
    // Predicated region
    $region22: #{tpu_custom_call.1} parent=1 // pred_check
      _
    $region23: #{tpu_custom_call.1} parent=1 // pred_check_branch
      %2949 = sbr.rel (0) target = $region25
    $region24: #{tpu_custom_call.1} parent=1 // pred_region
      %s2951 = ssub.s32 2048, 2048
      %2952 = vsyncadd [#allocation3], %s2951
      %s2953 = sshll.u32 [#allocation2], 4
      %s2954 = int_to_ptr.vmem [resolvable:$true] %s2953
      %2959 = dma.vmem_to_hbm [thread:$0]  %s2954, 2048, %s5, [#allocation3], 128, 128, 8
    $region25: #{tpu_custom_call.1} parent=1 // pred_fallthru
      _
    // Predicated region
    $region26: #{tpu_custom_call.1} parent=1 // pred_check
      _
    $region27: #{tpu_custom_call.1} parent=1 // pred_check_branch
      %2961 = sbr.rel (0) target = $region29
    $region28: #{tpu_custom_call.1} parent=1 // pred_region
      %2962 = dma.done [#allocation3], 2048
    $region29: #{tpu_custom_call.1} parent=1 // pred_fallthru
      _
    %2963 = vsyncpa [#allocation3], 1

</llo_original>
